<compile_context>
chip_gen: v7x
topology: tpu7x:2x2x1
jax: 0.10.0
libtpu: 0.0.40
codegen_flags: <defaults>
</compile_context>

<pallas_src>
import functools

import jax
import jax.numpy as jnp
from jax.experimental import pallas as pl
from jax.experimental.pallas import tpu as pltpu


def _round_up(x, m):
    return ((x + m - 1) // m) * m


# ----------------------------------------------------------------------------
# Encoder kernel: fused im2col-matmul conv stem -> ReLU -> GAP -> Linear(512)
# Grid: (batch blocks [parallel], spatial blocks [arbitrary / reduction])
# ----------------------------------------------------------------------------
def _encoder_kernel(patch_ref, wconv_ref, wfc_ref, bfc_ref, y_ref, acc_ref,
                    *, inv_p):
    s = pl.program_id(1)

    @pl.when(s == 0)
    def _init():
        acc_ref[...] = jnp.zeros_like(acc_ref)

    bb, pb, kp = patch_ref.shape
    c1 = wconv_ref.shape[1]

    # One lane-dense bf16 MXU dot with K = 9*C (zero-padded to 128 multiple).
    p2d = patch_ref[...].reshape(bb * pb, kp)
    conv = jnp.dot(p2d, wconv_ref[...], preferred_element_type=jnp.float32)
    conv = jnp.maximum(conv, 0.0)                       # ReLU (pre-pool)
    # Partial global-average-pool sums, accumulated across the spatial axis.
    acc_ref[...] += conv.reshape(bb, pb, c1).sum(axis=1)

    @pl.when(s == pl.num_programs(1) - 1)
    def _finalize():
        pooled = (acc_ref[...] * inv_p).astype(jnp.bfloat16)   # GAP = sum * 1/P
        y_ref[...] = (jnp.dot(pooled, wfc_ref[...],
                              preferred_element_type=jnp.float32)
                      + bfc_ref[...])


# ----------------------------------------------------------------------------
# Head kernel: projector MLP + predictor MLP (needs full-batch BN statistics)
# ----------------------------------------------------------------------------
def _mlp_block(x, w1_ref, g_ref, b_ref, w2_ref, b2_ref, eps, inv_b):
    """Linear(no bias) -> BatchNorm1d (training batch stats) -> ReLU -> Linear."""
    h = jnp.dot(x.astype(jnp.bfloat16), w1_ref[...],
                preferred_element_type=jnp.float32)
    mean = jnp.sum(h, axis=0, keepdims=True) * inv_b            # (1, H)
    centered = h - mean
    var = jnp.sum(centered * centered, axis=0, keepdims=True) * inv_b  # 2-pass
    hn = centered * jax.lax.rsqrt(var + eps)
    hn = hn * g_ref[...] + b_ref[...]
    hn = jnp.maximum(hn, 0.0)                                   # ReLU
    return (jnp.dot(hn.astype(jnp.bfloat16), w2_ref[...],
                    preferred_element_type=jnp.float32) + b2_ref[...])


def _head_kernel(y_ref,
                 pj_w1, pj_g, pj_b, pj_w2, pj_b2,
                 pd_w1, pd_g, pd_b, pd_w2, pd_b2,
                 z_ref, h_ref, *, eps, inv_b):
    y = y_ref[...]
    z = _mlp_block(y, pj_w1, pj_g, pj_b, pj_w2, pj_b2, eps, inv_b)
    z_ref[...] = z
    h_ref[...] = _mlp_block(z, pd_w1, pd_g, pd_b, pd_w2, pd_b2, eps, inv_b)


# ----------------------------------------------------------------------------
# Wrapper
# ----------------------------------------------------------------------------
def siamese_arm_forward(x_nchw, params, eps=1e-5):
    """Returns (y, z, h) exactly as SiameseArm.forward."""
    B, C, H, W = x_nchw.shape
    enc, pj, pd = params["encoder"], params["projector"], params["predictor"]

    # ---- host glue: NCHW -> NHWC, pad, im2col into one lane-dense bf16 slab
    x_nhwc = jnp.transpose(x_nchw, (0, 2, 3, 1))
    x_pad = jnp.pad(x_nhwc, ((0, 0), (1, 1), (1, 1), (0, 0)))
    cols = [x_pad[:, di:di + H, dj:dj + W, :]
            for di in range(3) for dj in range(3)]                # tap-major
    P = H * W
    K = 9 * C
    K_pad = _round_up(K, 128)
    patches = jnp.concatenate(cols, axis=-1).reshape(B, P, K)
    patches = jnp.pad(patches, ((0, 0), (0, 0), (0, K_pad - K)))
    patches = patches.astype(jnp.bfloat16)                       # (B, P, K_pad)

    C1, feat_dim = enc["w_fc"].shape
    w_conv = enc["w_conv"].reshape(K, C1)                        # tap-major K
    w_conv = jnp.pad(w_conv, ((0, K_pad - K), (0, 0))).astype(jnp.bfloat16)
    w_fc = enc["w_fc"].astype(jnp.bfloat16)
    b_fc = enc["b_fc"].reshape(1, -1).astype(jnp.float32)

    # Spatial tiling (v7x-safe: per-step live set is a few hundred KiB).
    P_blk = 128 if P % 128 == 0 else P
    grid = (1, P // P_blk)            # (batch blocks, spatial blocks)

    flops_enc = 2 * B * P * K_pad * C1 + 2 * B * C1 * feat_dim
    bytes_enc = (patches.size * 2 + w_conv.size * 2 + w_fc.size * 2
                 + b_fc.size * 4 + B * feat_dim * 4)

    y = pl.pallas_call(
        functools.partial(_encoder_kernel, inv_p=1.0 / P),
        out_shape=jax.ShapeDtypeStruct((B, feat_dim), jnp.float32),
        grid_spec=pltpu.PrefetchScalarGridSpec(
            num_scalar_prefetch=0,
            grid=grid,
            in_specs=[
                pl.BlockSpec((B, P_blk, K_pad), lambda b, s: (b, s, 0)),
                pl.BlockSpec((K_pad, C1), lambda b, s: (0, 0)),
                pl.BlockSpec((C1, feat_dim), lambda b, s: (0, 0)),
                pl.BlockSpec((1, feat_dim), lambda b, s: (0, 0)),
            ],
            out_specs=pl.BlockSpec((B, feat_dim), lambda b, s: (b, 0)),
            scratch_shapes=[pltpu.VMEM((B, C1), jnp.float32)],
        ),
        compiler_params=pltpu.CompilerParams(
            dimension_semantics=("parallel", "arbitrary"),
            vmem_limit_bytes=32 * 1024 * 1024),
        cost_estimate=pl.CostEstimate(flops=flops_enc, transcendentals=0,
                                      bytes_accessed=bytes_enc),
    )(patches, w_conv, w_fc, b_fc)

    # ---- projector + predictor head (ungridded: BN needs full-batch stats) --
    proj_hidden, proj_out = pj["w2"].shape
    pred_hidden, pred_out = pd["w2"].shape

    head_args = (
        y,
        pj["w1"].astype(jnp.bfloat16), pj["gamma"].reshape(1, -1),
        pj["beta"].reshape(1, -1),
        pj["w2"].astype(jnp.bfloat16), pj["b2"].reshape(1, -1),
        pd["w1"].astype(jnp.bfloat16), pd["gamma"].reshape(1, -1),
        pd["beta"].reshape(1, -1),
        pd["w2"].astype(jnp.bfloat16), pd["b2"].reshape(1, -1),
    )
    flops_head = 2 * B * (feat_dim * proj_hidden + proj_hidden * proj_out
                          + proj_out * pred_hidden + pred_hidden * pred_out)
    bytes_head = (sum(int(a.size) * a.dtype.itemsize for a in head_args)
                  + 4 * B * (proj_out + pred_out))

    _vmem = pl.BlockSpec(memory_space=pltpu.MemorySpace.VMEM)
    z, h = pl.pallas_call(
        functools.partial(_head_kernel, eps=eps, inv_b=1.0 / B),
        out_shape=(jax.ShapeDtypeStruct((B, proj_out), jnp.float32),
                   jax.ShapeDtypeStruct((B, pred_out), jnp.float32)),
        in_specs=[_vmem] * len(head_args),
        out_specs=(_vmem, _vmem),
        compiler_params=pltpu.CompilerParams(
            vmem_limit_bytes=32 * 1024 * 1024),
        cost_estimate=pl.CostEstimate(
            flops=flops_head,
            transcendentals=proj_hidden + pred_hidden,   # rsqrt per BN feature
            bytes_accessed=bytes_head),
    )(*head_args)
    return y, z, h


# ----------------------------------------------------------------------------
# Deterministic parameter init (stand-in encoder; MLPs match the PyTorch MLP)
# ----------------------------------------------------------------------------
def init_params(key, c_in=4, stem_channels=128, feat_dim=512,
                proj_hidden=512, proj_out=128, pred_hidden=128, pred_out=128):
    ks = jax.random.split(key, 8)

    def nrm(k, shape, scale=0.05):
        return scale * jax.random.normal(k, shape, dtype=jnp.float32)

    encoder = dict(
        w_conv=nrm(ks[0], (9, c_in, stem_channels)),   # 3x3 taps, tap-major
        w_fc=nrm(ks[1], (stem_channels, feat_dim)),
        b_fc=nrm(ks[2], (feat_dim,)),
    )
    projector = dict(
        w1=nrm(ks[3], (feat_dim, proj_hidden)),
        gamma=jnp.ones((proj_hidden,), jnp.float32),
        beta=jnp.zeros((proj_hidden,), jnp.float32),
        w2=nrm(ks[4], (proj_hidden, proj_out)),
        b2=nrm(ks[5], (proj_out,)),
    )
    predictor = dict(
        w1=nrm(ks[6], (proj_out, pred_hidden)),
        gamma=jnp.ones((pred_hidden,), jnp.float32),
        beta=jnp.zeros((pred_hidden,), jnp.float32),
        w2=nrm(ks[7], (pred_hidden, pred_out)),
        b2=jnp.zeros((pred_out,), jnp.float32),
    )
    return dict(encoder=encoder, projector=projector, predictor=predictor)


# ----------------------------------------------------------------------------
if __name__ == "__main__":
    key = jax.random.PRNGKey(0)
    k_x, k_p = jax.random.split(key)

    B, C, H, W = 2, 4, 16, 16
    x = jax.random.normal(k_x, (B, C, H, W), dtype=jnp.float32)
    params = init_params(k_p, c_in=C)

    y, z, h = jax.jit(siamese_arm_forward)(x, params)
    jax.block_until_ready((y, z, h))

    assert y.shape == (B, 512), y.shape
    assert z.shape == (B, 128), z.shape
    assert h.shape == (B, 128), h.shape
    print("KERNEL_OK")
</pallas_src>

<mosaic_0001>
module attributes {stable_mosaic.version = 11 : i64} {
  func.func @_encoder_kernel(%arg0: i32, %arg1: i32, %arg2: memref<2x128x128xbf16, #tpu.memory_space<vmem>>, %arg3: memref<128x128xbf16, #tpu.memory_space<vmem>>, %arg4: memref<128x512xbf16, #tpu.memory_space<vmem>>, %arg5: memref<1x512xf32, #tpu.memory_space<vmem>>, %arg6: memref<2x512xf32, #tpu.memory_space<vmem>>, %arg7: memref<2x128xf32, #tpu.memory_space<vmem>>) attributes {dimension_semantics = [#tpu.dimension_semantics<parallel>, #tpu.dimension_semantics<arbitrary>], iteration_bounds = array<i64: 1, 2>, scalar_prefetch = 0 : i64, scratch_operands = 1 : i64, tpu.core_type = #tpu.core_type<tc>, window_params = [{transform_indices = @transform_0, window_bounds = array<i64: 2, 128, 128>}, {pipeline_mode = #tpu.pipeline_mode<synchronous>, transform_indices = @transform_1, window_bounds = array<i64: 128, 128>}, {pipeline_mode = #tpu.pipeline_mode<synchronous>, transform_indices = @transform_2, window_bounds = array<i64: 128, 512>}, {pipeline_mode = #tpu.pipeline_mode<synchronous>, transform_indices = @transform_3, window_bounds = array<i64: 1, 512>}, {transform_indices = @transform_4, window_bounds = array<i64: 2, 512>}]} {
    %c0_i32 = arith.constant 0 : i32
    %0 = arith.cmpi eq, %arg1, %c0_i32 : i32
    %1 = arith.extui %0 : i1 to i32
    %c0_i32_0 = arith.constant 0 : i32
    %2 = arith.cmpi ne, %1, %c0_i32_0 : i32
    scf.if %2 {
      %cst_12 = arith.constant 0.000000e+00 : f32
      %17 = vector.broadcast %cst_12 : f32 to vector<2x128xf32>
      %c0_13 = arith.constant 0 : index
      %c0_14 = arith.constant 0 : index
      %18 = vector.load %arg7[%c0_13, %c0_14] : memref<2x128xf32, #tpu.memory_space<vmem>>, vector<2x128xf32>
      tpu.vector_store %arg7[%c0_13, %c0_14], %17 {strides = array<i32>} : memref<2x128xf32, #tpu.memory_space<vmem>>, vector<2x128xf32>,
    } else {
    }
    %c0 = arith.constant 0 : index
    %c0_1 = arith.constant 0 : index
    %c0_2 = arith.constant 0 : index
    %3 = vector.load %arg2[%c0, %c0_1, %c0_2] : memref<2x128x128xbf16, #tpu.memory_space<vmem>>, vector<2x128x128xbf16>
    %4 = vector.shape_cast %3 : vector<2x128x128xbf16> to vector<256x128xbf16>
    %c0_3 = arith.constant 0 : index
    %c0_4 = arith.constant 0 : index
    %5 = vector.load %arg3[%c0_3, %c0_4] : memref<128x128xbf16, #tpu.memory_space<vmem>>, vector<128x128xbf16>
    %cst = arith.constant dense<0.000000e+00> : vector<256x128xf32>
    %6 = tpu.matmul %4, %5, %cst {dimension_numbers = #tpu.dot_dimension_numbers<[1], [0], [0], [1], [0, 0, 1, 1], [], []>} : vector<256x128xbf16>, vector<128x128xbf16>, vector<256x128xf32> -> vector<256x128xf32>
    %cst_5 = arith.constant 0.000000e+00 : f32
    %7 = vector.broadcast %cst_5 : f32 to vector<256x128xf32>
    %8 = arith.maximumf %6, %7 : vector<256x128xf32>
    %c0_6 = arith.constant 0 : index
    %c0_7 = arith.constant 0 : index
    %9 = vector.load %arg7[%c0_6, %c0_7] : memref<2x128xf32, #tpu.memory_space<vmem>>, vector<2x128xf32>
    %10 = vector.shape_cast %8 : vector<256x128xf32> to vector<2x128x128xf32>
    %cst_8 = arith.constant dense<0.000000e+00> : vector<2x128xf32>
    %11 = vector.multi_reduction <add>, %10, %cst_8 [1] : vector<2x128x128xf32> to vector<2x128xf32>
    %12 = arith.addf %9, %11 : vector<2x128xf32>
    %c0_9 = arith.constant 0 : index
    %c0_10 = arith.constant 0 : index
    %13 = vector.load %arg7[%c0_9, %c0_10] : memref<2x128xf32, #tpu.memory_space<vmem>>, vector<2x128xf32>
    tpu.vector_store %arg7[%c0_9, %c0_10], %12 {strides = array<i32>} : memref<2x128xf32, #tpu.memory_space<vmem>>, vector<2x128xf32>,
    %c1_i32 = arith.constant 1 : i32
    %14 = arith.cmpi eq, %arg1, %c1_i32 : i32
    %15 = arith.extui %14 : i1 to i32
    %c0_i32_11 = arith.constant 0 : i32
    %16 = arith.cmpi ne, %15, %c0_i32_11 : i32
    scf.if %16 {
      %c0_12 = arith.constant 0 : index
      %c0_13 = arith.constant 0 : index
      %17 = vector.load %arg7[%c0_12, %c0_13] : memref<2x128xf32, #tpu.memory_space<vmem>>, vector<2x128xf32>
      %cst_14 = arith.constant 3.906250e-03 : f32
      %18 = vector.broadcast %cst_14 : f32 to vector<2x128xf32>
      %19 = arith.mulf %17, %18 : vector<2x128xf32>
      %20 = arith.truncf %19 : vector<2x128xf32> to vector<2x128xbf16>
      %c0_15 = arith.constant 0 : index
      %c0_16 = arith.constant 0 : index
      %21 = vector.load %arg4[%c0_15, %c0_16] : memref<128x512xbf16, #tpu.memory_space<vmem>>, vector<128x512xbf16>
      %cst_17 = arith.constant dense<0.000000e+00> : vector<2x512xf32>
      %22 = tpu.matmul %20, %21, %cst_17 {dimension_numbers = #tpu.dot_dimension_numbers<[1], [0], [0], [1], [0, 0, 1, 1], [], []>} : vector<2x128xbf16>, vector<128x512xbf16>, vector<2x512xf32> -> vector<2x512xf32>
      %c0_18 = arith.constant 0 : index
      %c0_19 = arith.constant 0 : index
      %23 = vector.load %arg5[%c0_18, %c0_19] : memref<1x512xf32, #tpu.memory_space<vmem>>, vector<1x512xf32>
      %24 = vector.broadcast %23 : vector<1x512xf32> to vector<2x512xf32>
      %25 = arith.addf %22, %24 : vector<2x512xf32>
      %c0_20 = arith.constant 0 : index
      %c0_21 = arith.constant 0 : index
      %26 = vector.load %arg6[%c0_20, %c0_21] : memref<2x512xf32, #tpu.memory_space<vmem>>, vector<2x512xf32>
      tpu.vector_store %arg6[%c0_20, %c0_21], %25 {strides = array<i32>} : memref<2x512xf32, #tpu.memory_space<vmem>>, vector<2x512xf32>,
    } else {
    }
    return
  }
  func.func @transform_0(%arg0: i32, %arg1: i32) -> (i32, i32, i32) {
    %c0_i32 = arith.constant 0 : i32
    %c0_i32_0 = arith.constant 0 : i32
    return %arg0, %arg1, %c0_i32 : i32, i32, i32
  }
  func.func @transform_1(%arg0: i32, %arg1: i32) -> (i32, i32) {
    %c0_i32 = arith.constant 0 : i32
    %c0_i32_0 = arith.constant 0 : i32
    %c0_i32_1 = arith.constant 0 : i32
    return %c0_i32, %c0_i32_0 : i32, i32
  }
  func.func @transform_2(%arg0: i32, %arg1: i32) -> (i32, i32) {
    %c0_i32 = arith.constant 0 : i32
    %c0_i32_0 = arith.constant 0 : i32
    %c0_i32_1 = arith.constant 0 : i32
    return %c0_i32, %c0_i32_0 : i32, i32
  }
  func.func @transform_3(%arg0: i32, %arg1: i32) -> (i32, i32) {
    %c0_i32 = arith.constant 0 : i32
    %c0_i32_0 = arith.constant 0 : i32
    %c0_i32_1 = arith.constant 0 : i32
    return %c0_i32, %c0_i32_0 : i32, i32
  }
  func.func @transform_4(%arg0: i32, %arg1: i32) -> (i32, i32) {
    %c0_i32 = arith.constant 0 : i32
    %c0_i32_0 = arith.constant 0 : i32
    return %arg0, %c0_i32 : i32, i32
  }
}

module attributes {stable_mosaic.version = 11 : i64} {
  func.func @_head_kernel(%arg0: memref<2x512xf32, #tpu.memory_space<vmem>>, %arg1: memref<512x512xbf16, #tpu.memory_space<vmem>>, %arg2: memref<1x512xf32, #tpu.memory_space<vmem>>, %arg3: memref<1x512xf32, #tpu.memory_space<vmem>>, %arg4: memref<512x128xbf16, #tpu.memory_space<vmem>>, %arg5: memref<1x128xf32, #tpu.memory_space<vmem>>, %arg6: memref<128x128xbf16, #tpu.memory_space<vmem>>, %arg7: memref<1x128xf32, #tpu.memory_space<vmem>>, %arg8: memref<1x128xf32, #tpu.memory_space<vmem>>, %arg9: memref<128x128xbf16, #tpu.memory_space<vmem>>, %arg10: memref<1x128xf32, #tpu.memory_space<vmem>>, %arg11: memref<2x128xf32, #tpu.memory_space<vmem>>, %arg12: memref<2x128xf32, #tpu.memory_space<vmem>>) attributes {dimension_semantics = [], scalar_prefetch = 0 : i64, scratch_operands = 0 : i64, tpu.core_type = #tpu.core_type<tc>} {
    %c0 = arith.constant 0 : index
    %c0_0 = arith.constant 0 : index
    %0 = vector.load %arg0[%c0, %c0_0] : memref<2x512xf32, #tpu.memory_space<vmem>>, vector<2x512xf32>
    %1 = arith.truncf %0 : vector<2x512xf32> to vector<2x512xbf16>
    %c0_1 = arith.constant 0 : index
    %c0_2 = arith.constant 0 : index
    %2 = vector.load %arg1[%c0_1, %c0_2] : memref<512x512xbf16, #tpu.memory_space<vmem>>, vector<512x512xbf16>
    %cst = arith.constant dense<0.000000e+00> : vector<2x512xf32>
    %3 = tpu.matmul %1, %2, %cst {dimension_numbers = #tpu.dot_dimension_numbers<[1], [0], [0], [1], [0, 0, 1, 1], [], []>} : vector<2x512xbf16>, vector<512x512xbf16>, vector<2x512xf32> -> vector<2x512xf32>
    %cst_3 = arith.constant dense<0.000000e+00> : vector<512xf32>
    %4 = vector.multi_reduction <add>, %3, %cst_3 [0] : vector<2x512xf32> to vector<512xf32>
    %5 = vector.shape_cast %4 : vector<512xf32> to vector<1x512xf32>
    %cst_4 = arith.constant 5.000000e-01 : f32
    %6 = vector.broadcast %cst_4 : f32 to vector<1x512xf32>
    %7 = arith.mulf %5, %6 : vector<1x512xf32>
    %8 = vector.broadcast %7 : vector<1x512xf32> to vector<2x512xf32>
    %9 = arith.subf %3, %8 : vector<2x512xf32>
    %10 = arith.mulf %9, %9 : vector<2x512xf32>
    %cst_5 = arith.constant dense<0.000000e+00> : vector<512xf32>
    %11 = vector.multi_reduction <add>, %10, %cst_5 [0] : vector<2x512xf32> to vector<512xf32>
    %12 = vector.shape_cast %11 : vector<512xf32> to vector<1x512xf32>
    %cst_6 = arith.constant 5.000000e-01 : f32
    %13 = vector.broadcast %cst_6 : f32 to vector<1x512xf32>
    %14 = arith.mulf %12, %13 : vector<1x512xf32>
    %cst_7 = arith.constant 9.99999974E-6 : f32
    %15 = vector.broadcast %cst_7 : f32 to vector<1x512xf32>
    %16 = arith.addf %14, %15 : vector<1x512xf32>
    %17 = math.rsqrt %16 : vector<1x512xf32>
    %18 = vector.broadcast %17 : vector<1x512xf32> to vector<2x512xf32>
    %19 = arith.mulf %9, %18 : vector<2x512xf32>
    %c0_8 = arith.constant 0 : index
    %c0_9 = arith.constant 0 : index
    %20 = vector.load %arg2[%c0_8, %c0_9] : memref<1x512xf32, #tpu.memory_space<vmem>>, vector<1x512xf32>
    %21 = vector.broadcast %20 : vector<1x512xf32> to vector<2x512xf32>
    %22 = arith.mulf %19, %21 : vector<2x512xf32>
    %c0_10 = arith.constant 0 : index
    %c0_11 = arith.constant 0 : index
    %23 = vector.load %arg3[%c0_10, %c0_11] : memref<1x512xf32, #tpu.memory_space<vmem>>, vector<1x512xf32>
    %24 = vector.broadcast %23 : vector<1x512xf32> to vector<2x512xf32>
    %25 = arith.addf %22, %24 : vector<2x512xf32>
    %cst_12 = arith.constant 0.000000e+00 : f32
    %26 = vector.broadcast %cst_12 : f32 to vector<2x512xf32>
    %27 = arith.maximumf %25, %26 : vector<2x512xf32>
    %28 = arith.truncf %27 : vector<2x512xf32> to vector<2x512xbf16>
    %c0_13 = arith.constant 0 : index
    %c0_14 = arith.constant 0 : index
    %29 = vector.load %arg4[%c0_13, %c0_14] : memref<512x128xbf16, #tpu.memory_space<vmem>>, vector<512x128xbf16>
    %cst_15 = arith.constant dense<0.000000e+00> : vector<2x128xf32>
    %30 = tpu.matmul %28, %29, %cst_15 {dimension_numbers = #tpu.dot_dimension_numbers<[1], [0], [0], [1], [0, 0, 1, 1], [], []>} : vector<2x512xbf16>, vector<512x128xbf16>, vector<2x128xf32> -> vector<2x128xf32>
    %c0_16 = arith.constant 0 : index
    %c0_17 = arith.constant 0 : index
    %31 = vector.load %arg5[%c0_16, %c0_17] : memref<1x128xf32, #tpu.memory_space<vmem>>, vector<1x128xf32>
    %32 = vector.broadcast %31 : vector<1x128xf32> to vector<2x128xf32>
    %33 = arith.addf %30, %32 : vector<2x128xf32>
    %c0_18 = arith.constant 0 : index
    %c0_19 = arith.constant 0 : index
    %34 = vector.load %arg11[%c0_18, %c0_19] : memref<2x128xf32, #tpu.memory_space<vmem>>, vector<2x128xf32>
    tpu.vector_store %arg11[%c0_18, %c0_19], %33 {strides = array<i32>} : memref<2x128xf32, #tpu.memory_space<vmem>>, vector<2x128xf32>,
    %35 = arith.truncf %33 : vector<2x128xf32> to vector<2x128xbf16>
    %c0_20 = arith.constant 0 : index
    %c0_21 = arith.constant 0 : index
    %36 = vector.load %arg6[%c0_20, %c0_21] : memref<128x128xbf16, #tpu.memory_space<vmem>>, vector<128x128xbf16>
    %cst_22 = arith.constant dense<0.000000e+00> : vector<2x128xf32>
    %37 = tpu.matmul %35, %36, %cst_22 {dimension_numbers = #tpu.dot_dimension_numbers<[1], [0], [0], [1], [0, 0, 1, 1], [], []>} : vector<2x128xbf16>, vector<128x128xbf16>, vector<2x128xf32> -> vector<2x128xf32>
    %cst_23 = arith.constant dense<0.000000e+00> : vector<128xf32>
    %38 = vector.multi_reduction <add>, %37, %cst_23 [0] : vector<2x128xf32> to vector<128xf32>
    %39 = vector.shape_cast %38 : vector<128xf32> to vector<1x128xf32>
    %cst_24 = arith.constant 5.000000e-01 : f32
    %40 = vector.broadcast %cst_24 : f32 to vector<1x128xf32>
    %41 = arith.mulf %39, %40 : vector<1x128xf32>
    %42 = vector.broadcast %41 : vector<1x128xf32> to vector<2x128xf32>
    %43 = arith.subf %37, %42 : vector<2x128xf32>
    %44 = arith.mulf %43, %43 : vector<2x128xf32>
    %cst_25 = arith.constant dense<0.000000e+00> : vector<128xf32>
    %45 = vector.multi_reduction <add>, %44, %cst_25 [0] : vector<2x128xf32> to vector<128xf32>
    %46 = vector.shape_cast %45 : vector<128xf32> to vector<1x128xf32>
    %cst_26 = arith.constant 5.000000e-01 : f32
    %47 = vector.broadcast %cst_26 : f32 to vector<1x128xf32>
    %48 = arith.mulf %46, %47 : vector<1x128xf32>
    %cst_27 = arith.constant 9.99999974E-6 : f32
    %49 = vector.broadcast %cst_27 : f32 to vector<1x128xf32>
    %50 = arith.addf %48, %49 : vector<1x128xf32>
    %51 = math.rsqrt %50 : vector<1x128xf32>
    %52 = vector.broadcast %51 : vector<1x128xf32> to vector<2x128xf32>
    %53 = arith.mulf %43, %52 : vector<2x128xf32>
    %c0_28 = arith.constant 0 : index
    %c0_29 = arith.constant 0 : index
    %54 = vector.load %arg7[%c0_28, %c0_29] : memref<1x128xf32, #tpu.memory_space<vmem>>, vector<1x128xf32>
    %55 = vector.broadcast %54 : vector<1x128xf32> to vector<2x128xf32>
    %56 = arith.mulf %53, %55 : vector<2x128xf32>
    %c0_30 = arith.constant 0 : index
    %c0_31 = arith.constant 0 : index
    %57 = vector.load %arg8[%c0_30, %c0_31] : memref<1x128xf32, #tpu.memory_space<vmem>>, vector<1x128xf32>
    %58 = vector.broadcast %57 : vector<1x128xf32> to vector<2x128xf32>
    %59 = arith.addf %56, %58 : vector<2x128xf32>
    %cst_32 = arith.constant 0.000000e+00 : f32
    %60 = vector.broadcast %cst_32 : f32 to vector<2x128xf32>
    %61 = arith.maximumf %59, %60 : vector<2x128xf32>
    %62 = arith.truncf %61 : vector<2x128xf32> to vector<2x128xbf16>
    %c0_33 = arith.constant 0 : index
    %c0_34 = arith.constant 0 : index
    %63 = vector.load %arg9[%c0_33, %c0_34] : memref<128x128xbf16, #tpu.memory_space<vmem>>, vector<128x128xbf16>
    %cst_35 = arith.constant dense<0.000000e+00> : vector<2x128xf32>
    %64 = tpu.matmul %62, %63, %cst_35 {dimension_numbers = #tpu.dot_dimension_numbers<[1], [0], [0], [1], [0, 0, 1, 1], [], []>} : vector<2x128xbf16>, vector<128x128xbf16>, vector<2x128xf32> -> vector<2x128xf32>
    %c0_36 = arith.constant 0 : index
    %c0_37 = arith.constant 0 : index
    %65 = vector.load %arg10[%c0_36, %c0_37] : memref<1x128xf32, #tpu.memory_space<vmem>>, vector<1x128xf32>
    %66 = vector.broadcast %65 : vector<1x128xf32> to vector<2x128xf32>
    %67 = arith.addf %64, %66 : vector<2x128xf32>
    %c0_38 = arith.constant 0 : index
    %c0_39 = arith.constant 0 : index
    %68 = vector.load %arg12[%c0_38, %c0_39] : memref<2x128xf32, #tpu.memory_space<vmem>>, vector<2x128xf32>
    tpu.vector_store %arg12[%c0_38, %c0_39], %67 {strides = array<i32>} : memref<2x128xf32, #tpu.memory_space<vmem>>, vector<2x128xf32>,
    return
  }
}

</mosaic_0001>

<llo_original>
// kernel: siamese_arm_forward.2
$region0: #{siamese_arm_forward.2}
  #allocation0 [shape = 'u32[]', space=smem, size = 0x4, offset = 0x4, fixed_abs, tag = 'smem constant byte address 0x4 - core index']
  #allocation1 [shape = 'u32[144,128]{1,0:T(1,128)}', space=vmem, size = 0x12000, scoped, tag = 'internal scratch']
  #allocation2 [shape = 'f32[2,128]{1,0:T(2,128)}', space=vmem, size = 0x400, scoped, tag = 'scratch operand']
  %s0 = inlined_call_operand.vmem [shape: bf16[2,256,128], index: 0, kind: input, shape index: {}]
  %s1 = inlined_call_operand.vmem [shape: bf16[128,128], index: 1, kind: input, shape index: {}]
  %s2 = inlined_call_operand.vmem [shape: bf16[128,512], index: 2, kind: input, shape index: {}]
  %s3 = inlined_call_operand.vmem [shape: f32[1,512], index: 3, kind: input, shape index: {}]
  %s4 = inlined_call_operand.vmem [shape: f32[2,512], index: 4, kind: output, shape index: {}]
  %s5 = sld [smem:[#allocation0]]
  $region98: #{siamese_arm_forward.2} parent=0
    _
  %s7 = ssub.s32 1, %s5
  %s8 = scalar_select 0, %s7, %s5
  $region1: #{siamese_arm_forward.2} parent=0
    #allocation3 [shape = 'u8[131072]{0}', space=vmem, size = 0x20000, scoped, tag = 'input window, operand 0']
    loop: start=0, step=1, limit=4
    $region2: #{siamese_arm_forward.2} parent=1 // loop_pre_header
      _
    $region3: #{siamese_arm_forward.2} parent=1 // loop_header
      %s10 = sphi 0, %s14
      %p11 = scmp.ge.s32.totalorder %s10, 4
      %s17 = sphi 0, %s29
      %s18 = sphi 0, %s25
      %s19 = sphi 0, %s17
      %s20 = sphi 0, %s18
      %s21 = sphi 0, %s19
      %s22 = sphi 0, %s20
      %s34 = sphi 0, %s36
      %s37 = sphi 0, %s34
      %s38 = sphi 0, %s37
      %s54 = sphi 0, %s38
      %s58 = sphi 0, %s58
      %s60 = sphi 0, %s58
      %s61 = sphi 0, %s60
      %s75 = sphi 0, %s61
      %s79 = sphi 0, %s79
      %s81 = sphi 0, %s79
      %s82 = sphi 0, %s81
      %s96 = sphi 0, %s82
      %s100 = sphi 0, %s100
      %s102 = sphi 0, %s100
      %s103 = sphi 0, %s102
      %s117 = sphi 0, %s103
      %s123 = sphi 0, %s125
      %s126 = sphi 0, %s123
      %s127 = sphi 0, %s126
      %s143 = sphi 0, %s127
    $region4: #{siamese_arm_forward.2} parent=1 // loop_header_branch
      %13 = sbr.rel (%p11) target = $region8
    $region5: #{siamese_arm_forward.2} parent=1 // loop_body
      %s15 = ssub.s32 %s10, 1
      %s16 = ssub.s32 %s10, 2
      %s23 = sadd.s32 1, %s18
      %p24 = scmp.ge.s32.totalorder %s23, 2
      %s25 = scalar_select %p24, 0, %s23
      %s26 = sadd.s32 1, %s17
      %s27 = scalar_select %p24, %s26, %s17
      %p28 = scmp.ge.s32.totalorder %s27, 1
      %s29 = scalar_select %p28, 0, %s27
      %s30 = ssub.s32 %s17, %s29
      %s31 = ssub.s32 %s18, %s25
      %s32 = sor.u32 %s30, %s31
      %p33 = scmp.eq.s32.totalorder %s32, 0
      %s35 = sadd.s32 %s34, 1
      %s36 = scalar_select %p33, %s34, %s35
      %p39 = pneg %p33
      %p40 = scmp.eq.s32.totalorder %s10, 1
      %p41 = por %p39, %p40
      %p42 = scmp.ne.s32.totalorder %s34, %s37
      %p43 = scmp.eq.s32.totalorder %s10, 0
      %p44 = por %p42, %p43
      %p45 = scmp.ne.s32.totalorder %s34, %s37
      %p46 = scmp.eq.s32.totalorder %s15, 1
      %p47 = por %p45, %p46
      %p48 = scmp.ne.s32.totalorder %s37, %s38
      %p49 = scmp.eq.s32.totalorder %s15, 0
      %p50 = por %p48, %p49
      %p51 = scmp.ne.s32.totalorder %s37, %s38
      %p52 = scmp.eq.s32.totalorder %s16, 1
      %p53 = por %p51, %p52
      %p55 = scmp.ne.s32.totalorder %s38, %s54
      %p56 = scmp.eq.s32.totalorder %s16, 0
      %p57 = por %p55, %p56
      %s59 = sadd.s32 %s58, 1
      %p62 = scmp.eq.s32.totalorder %s10, 1
      %p63 = scmp.ne.s32.totalorder %s58, %s60
      %p64 = scmp.eq.s32.totalorder %s10, 0
      %p65 = por %p63, %p64
      %p66 = scmp.ne.s32.totalorder %s58, %s60
      %p67 = scmp.eq.s32.totalorder %s15, 1
      %p68 = por %p66, %p67
      %p69 = scmp.ne.s32.totalorder %s60, %s61
      %p70 = scmp.eq.s32.totalorder %s15, 0
      %p71 = por %p69, %p70
      %p72 = scmp.ne.s32.totalorder %s60, %s61
      %p73 = scmp.eq.s32.totalorder %s16, 1
      %p74 = por %p72, %p73
      %p76 = scmp.ne.s32.totalorder %s61, %s75
      %p77 = scmp.eq.s32.totalorder %s16, 0
      %p78 = por %p76, %p77
      %s80 = sadd.s32 %s79, 1
      %p83 = scmp.eq.s32.totalorder %s10, 1
      %p84 = scmp.ne.s32.totalorder %s79, %s81
      %p85 = scmp.eq.s32.totalorder %s10, 0
      %p86 = por %p84, %p85
      %p87 = scmp.ne.s32.totalorder %s79, %s81
      %p88 = scmp.eq.s32.totalorder %s15, 1
      %p89 = por %p87, %p88
      %p90 = scmp.ne.s32.totalorder %s81, %s82
      %p91 = scmp.eq.s32.totalorder %s15, 0
      %p92 = por %p90, %p91
      %p93 = scmp.ne.s32.totalorder %s81, %s82
      %p94 = scmp.eq.s32.totalorder %s16, 1
      %p95 = por %p93, %p94
      %p97 = scmp.ne.s32.totalorder %s82, %s96
      %p98 = scmp.eq.s32.totalorder %s16, 0
      %p99 = por %p97, %p98
      %s101 = sadd.s32 %s100, 1
      %p104 = scmp.eq.s32.totalorder %s10, 1
      %p105 = scmp.ne.s32.totalorder %s100, %s102
      %p106 = scmp.eq.s32.totalorder %s10, 0
      %p107 = por %p105, %p106
      %p108 = scmp.ne.s32.totalorder %s100, %s102
      %p109 = scmp.eq.s32.totalorder %s15, 1
      %p110 = por %p108, %p109
      %p111 = scmp.ne.s32.totalorder %s102, %s103
      %p112 = scmp.eq.s32.totalorder %s15, 0
      %p113 = por %p111, %p112
      %p114 = scmp.ne.s32.totalorder %s102, %s103
      %p115 = scmp.eq.s32.totalorder %s16, 1
      %p116 = por %p114, %p115
      %p118 = scmp.ne.s32.totalorder %s103, %s117
      %p119 = scmp.eq.s32.totalorder %s16, 0
      %p120 = por %p118, %p119
      %s121 = ssub.s32 %s17, %s29
      %p122 = scmp.eq.s32.totalorder %s121, 0
      %s124 = sadd.s32 %s123, 1
      %s125 = scalar_select %p122, %s123, %s124
      %p128 = pneg %p122
      %p129 = scmp.eq.s32.totalorder %s10, 1
      %p130 = por %p128, %p129
      %p131 = scmp.ne.s32.totalorder %s123, %s126
      %p132 = scmp.eq.s32.totalorder %s10, 0
      %p133 = por %p131, %p132
      %p134 = scmp.ne.s32.totalorder %s123, %s126
      %p135 = scmp.eq.s32.totalorder %s15, 1
      %p136 = por %p134, %p135
      %p137 = scmp.ne.s32.totalorder %s126, %s127
      %p138 = scmp.eq.s32.totalorder %s15, 0
      %p139 = por %p137, %p138
      %p140 = scmp.ne.s32.totalorder %s126, %s127
      %p141 = scmp.eq.s32.totalorder %s16, 1
      %p142 = por %p140, %p141
      %p144 = scmp.ne.s32.totalorder %s127, %s143
      %p145 = scmp.eq.s32.totalorder %s16, 0
      %p146 = por %p144, %p145
      %p147 = scmp.le.s32.totalorder 1, %s10
      %p148 = scmp.lt.s32.totalorder %s10, 3
      %p149 = pnand %p147, %p148
      %p150 = pneg %p149
      // Predicated region
      $region9: #{siamese_arm_forward.2} parent=5 // pred_check
        _
      $region10: #{siamese_arm_forward.2} parent=5 // pred_check_branch
        %152 = sbr.rel (%p149) target = $region12
      $region11: #{siamese_arm_forward.2} parent=5 // pred_region
        %s153 = ssub.s32 %s10, 1
        // Predicated region
        $region13: #{siamese_arm_forward.2} parent=11 // pred_check
          %p154 = pneg %p71
        $region14: #{siamese_arm_forward.2} parent=11 // pred_check_branch
          %156 = sbr.rel (%p154) target = $region16
        $region15: #{siamese_arm_forward.2} parent=11 // pred_region
          _
        $region16: #{siamese_arm_forward.2} parent=11 // pred_fallthru
          _
        // Predicated region
        $region17: #{siamese_arm_forward.2} parent=11 // pred_check
          %p157 = pneg %p92
        $region18: #{siamese_arm_forward.2} parent=11 // pred_check_branch
          %159 = sbr.rel (%p157) target = $region20
        $region19: #{siamese_arm_forward.2} parent=11 // pred_region
          _
        $region20: #{siamese_arm_forward.2} parent=11 // pred_fallthru
          _
        // Predicated region
        $region21: #{siamese_arm_forward.2} parent=11 // pred_check
          %p160 = pneg %p113
        $region22: #{siamese_arm_forward.2} parent=11 // pred_check_branch
          %162 = sbr.rel (%p160) target = $region24
        $region23: #{siamese_arm_forward.2} parent=11 // pred_region
          _
        $region24: #{siamese_arm_forward.2} parent=11 // pred_fallthru
          _
      $region12: #{siamese_arm_forward.2} parent=5 // pred_fallthru
        _
      %p163 = scmp.lt.s32.totalorder %s10, 2
      // Predicated region
      $region25: #{siamese_arm_forward.2} parent=5 // pred_check
        %p164 = pneg %p163
      $region26: #{siamese_arm_forward.2} parent=5 // pred_check_branch
        %166 = sbr.rel (%p164) target = $region28
      $region27: #{siamese_arm_forward.2} parent=5 // pred_region
        // Predicated region
        $region29: #{siamese_arm_forward.2} parent=27 // pred_check
          %p167 = pneg %p44
        $region30: #{siamese_arm_forward.2} parent=27 // pred_check_branch
          %169 = sbr.rel (%p167) target = $region32
        $region31: #{siamese_arm_forward.2} parent=27 // pred_region
          %s170 = sand.u32 %s34, 1
          %s171 = sand.u32 %s34, 1
          %s172 = smul.addr %s171, 128
          %s173 = scalar_lea.vmem [#allocation3], %s172
          %s174 = smul.u32 2, %s17
          %s175 = smul.u32 16, %s18
          %s176 = smul.addr %s174, 32
          %s177 = sadd.s32 %s175, %s176
          %s178 = smul.addr %s177, 4
          %s179 = scalar_lea.vmem %s0, %s178
          // Predicated region
          $region33: #{siamese_arm_forward.2} parent=31 // pred_check
            _
          $region34: #{siamese_arm_forward.2} parent=31 // pred_check_branch
            %181 = sbr.rel (0) target = $region36
          $region35: #{siamese_arm_forward.2} parent=31 // pred_region
            // Predicated region
            $region37: #{siamese_arm_forward.2} parent=35 // pred_check
              _
            $region38: #{siamese_arm_forward.2} parent=35 // pred_check_branch
              %183 = sbr.rel target = $region40
            $region39: #{siamese_arm_forward.2} parent=35 // pred_region
              // Predicated region
              $region52: #{siamese_arm_forward.2} parent=39 // pred_check
                _
              $region53: #{siamese_arm_forward.2} parent=39 // pred_check_branch
                %260 = sbr.rel (0) target = $region55
              $region54: #{siamese_arm_forward.2} parent=39 // pred_region
                loop: start=0, step=1, limit=1
                $region56: #{siamese_arm_forward.2} parent=54 // loop_pre_header
                  _
                $region57: #{siamese_arm_forward.2} parent=54 // loop_header
                  %s262 = sphi 0, %s266
                  %p263 = scmp.ge.s32.totalorder %s262, 1
                  %s267 = sphi %s179, %s179
                  %s268 = sphi %s173, %s173
                $region58: #{siamese_arm_forward.2} parent=54 // loop_header_branch
                  %265 = sbr.rel (%p263) target = $region62
                $region59: #{siamese_arm_forward.2} parent=54 // loop_body
                  _
                $region60: #{siamese_arm_forward.2} parent=54 // loop_footer
                  %s266 = sadd.s32 1, %s262
                $region61: #{siamese_arm_forward.2} parent=54 // loop_footer_branch
                  %261 = sbr.rel target = $region57
                $region62: #{siamese_arm_forward.2} parent=54 // loop_exit
                  _
                loop: start=0, step=1, limit=1
                $region63: #{siamese_arm_forward.2} parent=54 // loop_pre_header
                  _
                $region64: #{siamese_arm_forward.2} parent=54 // loop_header
                  %s271 = sphi 0, %s275
                  %p272 = scmp.ge.s32.totalorder %s271, 1
                  %s276 = sphi %s179, %s179
                  %s277 = sphi %s173, %s173
                $region65: #{siamese_arm_forward.2} parent=54 // loop_header_branch
                  %274 = sbr.rel (%p272) target = $region69
                $region66: #{siamese_arm_forward.2} parent=54 // loop_body
                  %v278 = vld [vmem:[%s276] sm:$0xf]
                  %279 = vst [vmem:[%s277] sm:$0xf] %v278
                  %v280 = vld [vmem:[%s276 + $0x4] sm:$0xf]
                  %281 = vst [vmem:[%s277 + $0x4] sm:$0xf] %v280
                  %v282 = vld [vmem:[%s276 + $0x8] sm:$0xf]
                  %283 = vst [vmem:[%s277 + $0x8] sm:$0xf] %v282
                  %v284 = vld [vmem:[%s276 + $0xc] sm:$0xf]
                  %285 = vst [vmem:[%s277 + $0xc] sm:$0xf] %v284
                  %v286 = vld [vmem:[%s276 + $0x10] sm:$0xf]
                  %287 = vst [vmem:[%s277 + $0x10] sm:$0xf] %v286
                  %v288 = vld [vmem:[%s276 + $0x14] sm:$0xf]
                  %289 = vst [vmem:[%s277 + $0x14] sm:$0xf] %v288
                  %v290 = vld [vmem:[%s276 + $0x18] sm:$0xf]
                  %291 = vst [vmem:[%s277 + $0x18] sm:$0xf] %v290
                  %v292 = vld [vmem:[%s276 + $0x1c] sm:$0xf]
                  %293 = vst [vmem:[%s277 + $0x1c] sm:$0xf] %v292
                  %v294 = vld [vmem:[%s276 + $0x20] sm:$0xf]
                  %295 = vst [vmem:[%s277 + $0x20] sm:$0xf] %v294
                  %v296 = vld [vmem:[%s276 + $0x24] sm:$0xf]
                  %297 = vst [vmem:[%s277 + $0x24] sm:$0xf] %v296
                  %v298 = vld [vmem:[%s276 + $0x28] sm:$0xf]
                  %299 = vst [vmem:[%s277 + $0x28] sm:$0xf] %v298
                  %v300 = vld [vmem:[%s276 + $0x2c] sm:$0xf]
                  %301 = vst [vmem:[%s277 + $0x2c] sm:$0xf] %v300
                  %v302 = vld [vmem:[%s276 + $0x30] sm:$0xf]
                  %303 = vst [vmem:[%s277 + $0x30] sm:$0xf] %v302
                  %v304 = vld [vmem:[%s276 + $0x34] sm:$0xf]
                  %305 = vst [vmem:[%s277 + $0x34] sm:$0xf] %v304
                  %v306 = vld [vmem:[%s276 + $0x38] sm:$0xf]
                  %307 = vst [vmem:[%s277 + $0x38] sm:$0xf] %v306
                  %v308 = vld [vmem:[%s276 + $0x3c] sm:$0xf]
                  %309 = vst [vmem:[%s277 + $0x3c] sm:$0xf] %v308
                  %v310 = vld [vmem:[%s276 + $0x80] sm:$0xf]
                  %311 = vst [vmem:[%s277 + $0x40] sm:$0xf] %v310
                  %v312 = vld [vmem:[%s276 + $0x84] sm:$0xf]
                  %313 = vst [vmem:[%s277 + $0x44] sm:$0xf] %v312
                  %v314 = vld [vmem:[%s276 + $0x88] sm:$0xf]
                  %315 = vst [vmem:[%s277 + $0x48] sm:$0xf] %v314
                  %v316 = vld [vmem:[%s276 + $0x8c] sm:$0xf]
                  %317 = vst [vmem:[%s277 + $0x4c] sm:$0xf] %v316
                  %v318 = vld [vmem:[%s276 + $0x90] sm:$0xf]
                  %319 = vst [vmem:[%s277 + $0x50] sm:$0xf] %v318
                  %v320 = vld [vmem:[%s276 + $0x94] sm:$0xf]
                  %321 = vst [vmem:[%s277 + $0x54] sm:$0xf] %v320
                  %v322 = vld [vmem:[%s276 + $0x98] sm:$0xf]
                  %323 = vst [vmem:[%s277 + $0x58] sm:$0xf] %v322
                  %v324 = vld [vmem:[%s276 + $0x9c] sm:$0xf]
                  %325 = vst [vmem:[%s277 + $0x5c] sm:$0xf] %v324
                  %v326 = vld [vmem:[%s276 + $0xa0] sm:$0xf]
                  %327 = vst [vmem:[%s277 + $0x60] sm:$0xf] %v326
                  %v328 = vld [vmem:[%s276 + $0xa4] sm:$0xf]
                  %329 = vst [vmem:[%s277 + $0x64] sm:$0xf] %v328
                  %v330 = vld [vmem:[%s276 + $0xa8] sm:$0xf]
                  %331 = vst [vmem:[%s277 + $0x68] sm:$0xf] %v330
                  %v332 = vld [vmem:[%s276 + $0xac] sm:$0xf]
                  %333 = vst [vmem:[%s277 + $0x6c] sm:$0xf] %v332
                  %v334 = vld [vmem:[%s276 + $0xb0] sm:$0xf]
                  %335 = vst [vmem:[%s277 + $0x70] sm:$0xf] %v334
                  %v336 = vld [vmem:[%s276 + $0xb4] sm:$0xf]
                  %337 = vst [vmem:[%s277 + $0x74] sm:$0xf] %v336
                  %v338 = vld [vmem:[%s276 + $0xb8] sm:$0xf]
                  %339 = vst [vmem:[%s277 + $0x78] sm:$0xf] %v338
                  %v340 = vld [vmem:[%s276 + $0xbc] sm:$0xf]
                  %341 = vst [vmem:[%s277 + $0x7c] sm:$0xf] %v340
                $region67: #{siamese_arm_forward.2} parent=54 // loop_footer
                  %s275 = sadd.s32 1, %s271
                $region68: #{siamese_arm_forward.2} parent=54 // loop_footer_branch
                  %270 = sbr.rel target = $region64
                $region69: #{siamese_arm_forward.2} parent=54 // loop_exit
                  _
              $region55: #{siamese_arm_forward.2} parent=39 // pred_fallthru
                _
            $region40: #{siamese_arm_forward.2} parent=35 // pred_fallthru
              _
            // Predicated region
            $region41: #{siamese_arm_forward.2} parent=35 // pred_check
              _
            $region42: #{siamese_arm_forward.2} parent=35 // pred_check_branch
              %185 = sbr.rel (0) target = $region44
            $region43: #{siamese_arm_forward.2} parent=35 // pred_region
              loop: start=0, step=1, limit=1
              $region45: #{siamese_arm_forward.2} parent=43 // loop_pre_header
                _
              $region46: #{siamese_arm_forward.2} parent=43 // loop_header
                %s188 = sphi 0, %s192
                %p189 = scmp.ge.s32.totalorder %s188, 1
                %s193 = sphi %s179, %s179
                %s194 = sphi %s173, %s173
              $region47: #{siamese_arm_forward.2} parent=43 // loop_header_branch
                %191 = sbr.rel (%p189) target = $region51
              $region48: #{siamese_arm_forward.2} parent=43 // loop_body
                %v195 = vld [vmem:[%s193] sm:$0xf]
                %196 = vst [vmem:[%s194] sm:$0xf] %v195
                %v197 = vld [vmem:[%s193 + $0x4] sm:$0xf]
                %198 = vst [vmem:[%s194 + $0x4] sm:$0xf] %v197
                %v199 = vld [vmem:[%s193 + $0x8] sm:$0xf]
                %200 = vst [vmem:[%s194 + $0x8] sm:$0xf] %v199
                %v201 = vld [vmem:[%s193 + $0xc] sm:$0xf]
                %202 = vst [vmem:[%s194 + $0xc] sm:$0xf] %v201
                %v203 = vld [vmem:[%s193 + $0x10] sm:$0xf]
                %204 = vst [vmem:[%s194 + $0x10] sm:$0xf] %v203
                %v205 = vld [vmem:[%s193 + $0x14] sm:$0xf]
                %206 = vst [vmem:[%s194 + $0x14] sm:$0xf] %v205
                %v207 = vld [vmem:[%s193 + $0x18] sm:$0xf]
                %208 = vst [vmem:[%s194 + $0x18] sm:$0xf] %v207
                %v209 = vld [vmem:[%s193 + $0x1c] sm:$0xf]
                %210 = vst [vmem:[%s194 + $0x1c] sm:$0xf] %v209
                %v211 = vld [vmem:[%s193 + $0x20] sm:$0xf]
                %212 = vst [vmem:[%s194 + $0x20] sm:$0xf] %v211
                %v213 = vld [vmem:[%s193 + $0x24] sm:$0xf]
                %214 = vst [vmem:[%s194 + $0x24] sm:$0xf] %v213
                %v215 = vld [vmem:[%s193 + $0x28] sm:$0xf]
                %216 = vst [vmem:[%s194 + $0x28] sm:$0xf] %v215
                %v217 = vld [vmem:[%s193 + $0x2c] sm:$0xf]
                %218 = vst [vmem:[%s194 + $0x2c] sm:$0xf] %v217
                %v219 = vld [vmem:[%s193 + $0x30] sm:$0xf]
                %220 = vst [vmem:[%s194 + $0x30] sm:$0xf] %v219
                %v221 = vld [vmem:[%s193 + $0x34] sm:$0xf]
                %222 = vst [vmem:[%s194 + $0x34] sm:$0xf] %v221
                %v223 = vld [vmem:[%s193 + $0x38] sm:$0xf]
                %224 = vst [vmem:[%s194 + $0x38] sm:$0xf] %v223
                %v225 = vld [vmem:[%s193 + $0x3c] sm:$0xf]
                %226 = vst [vmem:[%s194 + $0x3c] sm:$0xf] %v225
                %v227 = vld [vmem:[%s193 + $0x80] sm:$0xf]
                %228 = vst [vmem:[%s194 + $0x40] sm:$0xf] %v227
                %v229 = vld [vmem:[%s193 + $0x84] sm:$0xf]
                %230 = vst [vmem:[%s194 + $0x44] sm:$0xf] %v229
                %v231 = vld [vmem:[%s193 + $0x88] sm:$0xf]
                %232 = vst [vmem:[%s194 + $0x48] sm:$0xf] %v231
                %v233 = vld [vmem:[%s193 + $0x8c] sm:$0xf]
                %234 = vst [vmem:[%s194 + $0x4c] sm:$0xf] %v233
                %v235 = vld [vmem:[%s193 + $0x90] sm:$0xf]
                %236 = vst [vmem:[%s194 + $0x50] sm:$0xf] %v235
                %v237 = vld [vmem:[%s193 + $0x94] sm:$0xf]
                %238 = vst [vmem:[%s194 + $0x54] sm:$0xf] %v237
                %v239 = vld [vmem:[%s193 + $0x98] sm:$0xf]
                %240 = vst [vmem:[%s194 + $0x58] sm:$0xf] %v239
                %v241 = vld [vmem:[%s193 + $0x9c] sm:$0xf]
                %242 = vst [vmem:[%s194 + $0x5c] sm:$0xf] %v241
                %v243 = vld [vmem:[%s193 + $0xa0] sm:$0xf]
                %244 = vst [vmem:[%s194 + $0x60] sm:$0xf] %v243
                %v245 = vld [vmem:[%s193 + $0xa4] sm:$0xf]
                %246 = vst [vmem:[%s194 + $0x64] sm:$0xf] %v245
                %v247 = vld [vmem:[%s193 + $0xa8] sm:$0xf]
                %248 = vst [vmem:[%s194 + $0x68] sm:$0xf] %v247
                %v249 = vld [vmem:[%s193 + $0xac] sm:$0xf]
                %250 = vst [vmem:[%s194 + $0x6c] sm:$0xf] %v249
                %v251 = vld [vmem:[%s193 + $0xb0] sm:$0xf]
                %252 = vst [vmem:[%s194 + $0x70] sm:$0xf] %v251
                %v253 = vld [vmem:[%s193 + $0xb4] sm:$0xf]
                %254 = vst [vmem:[%s194 + $0x74] sm:$0xf] %v253
                %v255 = vld [vmem:[%s193 + $0xb8] sm:$0xf]
                %256 = vst [vmem:[%s194 + $0x78] sm:$0xf] %v255
                %v257 = vld [vmem:[%s193 + $0xbc] sm:$0xf]
                %258 = vst [vmem:[%s194 + $0x7c] sm:$0xf] %v257
              $region49: #{siamese_arm_forward.2} parent=43 // loop_footer
                %s192 = sadd.s32 1, %s188
              $region50: #{siamese_arm_forward.2} parent=43 // loop_footer_branch
                %187 = sbr.rel target = $region46
              $region51: #{siamese_arm_forward.2} parent=43 // loop_exit
                _
            $region44: #{siamese_arm_forward.2} parent=35 // pred_fallthru
              _
          $region36: #{siamese_arm_forward.2} parent=31 // pred_fallthru
            _
          %342 = vnop
        $region32: #{siamese_arm_forward.2} parent=27 // pred_fallthru
          _
      $region28: #{siamese_arm_forward.2} parent=5 // pred_fallthru
        _
      %p343 = scmp.le.s32.totalorder 1, %s10
      %p344 = scmp.lt.s32.totalorder %s10, 3
      %p345 = pnand %p343, %p344
      %p346 = pneg %p345
      // Predicated region
      $region70: #{siamese_arm_forward.2} parent=5 // pred_check
        _
      $region71: #{siamese_arm_forward.2} parent=5 // pred_check_branch
        %348 = sbr.rel (%p345) target = $region73
      $region72: #{siamese_arm_forward.2} parent=5 // pred_region
        %s349 = ssub.s32 %s10, 1
        %s350 = sand.u32 %s37, 1
        %s351 = sand.u32 %s37, 1
        %s352 = smul.addr %s351, 128
        %s353 = scalar_lea.vmem [#allocation3], %s352
        // Predicated region
        $region74: #{siamese_arm_forward.2} parent=72 // pred_check
          %p354 = pneg %p50
        $region75: #{siamese_arm_forward.2} parent=72 // pred_check_branch
          %356 = sbr.rel (%p354) target = $region77
        $region76: #{siamese_arm_forward.2} parent=72 // pred_region
          _
        $region77: #{siamese_arm_forward.2} parent=72 // pred_fallthru
          _
        %s357 = sand.u32 %s37, 1
        %s358 = sand.u32 %s37, 1
        %s359 = smul.addr %s358, 128
        %s360 = scalar_lea.vmem [#allocation3], %s359
        %p361 = pneg %p50
        %p362 = pneg %p47
        %p363 = pneg %p71
        %p364 = pneg %p68
        %p365 = pneg %p92
        %p366 = pneg %p89
        %p367 = pneg %p113
        %p368 = pneg %p110
        %p369 = pneg %p139
        %p370 = pneg %p136
        %p371 = scmp.lt.s32.totalorder %s19, 0
        %s372 = scalar_select %p371, %s19, 0
        %s373 = smul.addr %s372, 4
        %s374 = smul.addr %s373, 2
        %s375 = scalar_lea.vmem %s4, %s374
        %s376 = smul.u32 2, %s19
        %s377 = smul.u32 16, %s20
        %p378 = scmp.lt.s32.totalorder %s19, 0
        %s379 = scalar_select %p378, %s19, 0
        %s380 = smul.addr %s379, 4
        %s381 = smul.addr %s380, 2
        %s382 = scalar_lea.vmem %s4, %s381
        %p384 = scmp.eq.s32.totalorder %s20, 0
        // Predicated region
        $region78: #{siamese_arm_forward.2} parent=72 // pred_check
          %p385 = pneg %p384
        $region79: #{siamese_arm_forward.2} parent=72 // pred_check_branch
          %387 = sbr.rel (%p385) target = $region81
        $region80: #{siamese_arm_forward.2} parent=72 // pred_region
          %388 = vst [vmem:[#allocation2] sm:$0x3] 0.0
        $region81: #{siamese_arm_forward.2} parent=72 // pred_fallthru
          _
        %v389 = vld [vmem:[%s353] sm:$0xf]
        %v390 = vld [vmem:[%s353 + $0x4] sm:$0xf]
        %v391 = vld [vmem:[%s353 + $0x8] sm:$0xf]
        %v392 = vld [vmem:[%s353 + $0xc] sm:$0xf]
        %v393 = vld [vmem:[%s353 + $0x10] sm:$0xf]
        %v394 = vld [vmem:[%s353 + $0x14] sm:$0xf]
        %v395 = vld [vmem:[%s353 + $0x18] sm:$0xf]
        %v396 = vld [vmem:[%s353 + $0x1c] sm:$0xf]
        %v397 = vld [vmem:[%s353 + $0x20] sm:$0xf]
        %v398 = vld [vmem:[%s353 + $0x24] sm:$0xf]
        %v399 = vld [vmem:[%s353 + $0x28] sm:$0xf]
        %v400 = vld [vmem:[%s353 + $0x2c] sm:$0xf]
        %v401 = vld [vmem:[%s353 + $0x30] sm:$0xf]
        %v402 = vld [vmem:[%s353 + $0x34] sm:$0xf]
        %v403 = vld [vmem:[%s353 + $0x38] sm:$0xf]
        %v404 = vld [vmem:[%s353 + $0x3c] sm:$0xf]
        %v405 = vld [vmem:[%s353 + $0x40] sm:$0xf]
        %v406 = vld [vmem:[%s353 + $0x44] sm:$0xf]
        %v407 = vld [vmem:[%s353 + $0x48] sm:$0xf]
        %v408 = vld [vmem:[%s353 + $0x4c] sm:$0xf]
        %v409 = vld [vmem:[%s353 + $0x50] sm:$0xf]
        %v410 = vld [vmem:[%s353 + $0x54] sm:$0xf]
        %v411 = vld [vmem:[%s353 + $0x58] sm:$0xf]
        %v412 = vld [vmem:[%s353 + $0x5c] sm:$0xf]
        %v413 = vld [vmem:[%s353 + $0x60] sm:$0xf]
        %v414 = vld [vmem:[%s353 + $0x64] sm:$0xf]
        %v415 = vld [vmem:[%s353 + $0x68] sm:$0xf]
        %v416 = vld [vmem:[%s353 + $0x6c] sm:$0xf]
        %v417 = vld [vmem:[%s353 + $0x70] sm:$0xf]
        %v418 = vld [vmem:[%s353 + $0x74] sm:$0xf]
        %v419 = vld [vmem:[%s353 + $0x78] sm:$0xf]
        %v420 = vld [vmem:[%s353 + $0x7c] sm:$0xf]
        %v421 = vld [vmem:[%s1] sm:$0xf]
        %v422 = vld [vmem:[%s1 + $0x4] sm:$0xf]
        %v423 = vld [vmem:[%s1 + $0x8] sm:$0xf]
        %v424 = vld [vmem:[%s1 + $0xc] sm:$0xf]
        %v425 = vld [vmem:[%s1 + $0x10] sm:$0xf]
        %v426 = vld [vmem:[%s1 + $0x14] sm:$0xf]
        %v427 = vld [vmem:[%s1 + $0x18] sm:$0xf]
        %v428 = vld [vmem:[%s1 + $0x1c] sm:$0xf]
        %v429 = vld [vmem:[%s1 + $0x20] sm:$0xf]
        %v430 = vld [vmem:[%s1 + $0x24] sm:$0xf]
        %v431 = vld [vmem:[%s1 + $0x28] sm:$0xf]
        %v432 = vld [vmem:[%s1 + $0x2c] sm:$0xf]
        %v433 = vld [vmem:[%s1 + $0x30] sm:$0xf]
        %v434 = vld [vmem:[%s1 + $0x34] sm:$0xf]
        %v435 = vld [vmem:[%s1 + $0x38] sm:$0xf]
        %v436 = vld [vmem:[%s1 + $0x3c] sm:$0xf]
        %v469 = vunpack.c.l.b16 %v389
        %v470 = vunpack.c.l.b16 %v390
        %v471 = vunpack.c.l.b16 %v391
        %v472 = vunpack.c.l.b16 %v392
        %v473 = vunpack.c.l.b16 %v393
        %v474 = vunpack.c.l.b16 %v394
        %v475 = vunpack.c.l.b16 %v395
        %v476 = vunpack.c.l.b16 %v396
        %v477 = vunpack.c.l.b16 %v397
        %v478 = vunpack.c.l.b16 %v398
        %v479 = vunpack.c.l.b16 %v399
        %v480 = vunpack.c.l.b16 %v400
        %v481 = vunpack.c.l.b16 %v401
        %v482 = vunpack.c.l.b16 %v402
        %v483 = vunpack.c.l.b16 %v403
        %v484 = vunpack.c.l.b16 %v404
        %v485 = vunpack.c.l.b16 %v405
        %v486 = vunpack.c.l.b16 %v406
        %v487 = vunpack.c.l.b16 %v407
        %v488 = vunpack.c.l.b16 %v408
        %v489 = vunpack.c.l.b16 %v409
        %v490 = vunpack.c.l.b16 %v410
        %v491 = vunpack.c.l.b16 %v411
        %v492 = vunpack.c.l.b16 %v412
        %v493 = vunpack.c.l.b16 %v413
        %v494 = vunpack.c.l.b16 %v414
        %v495 = vunpack.c.l.b16 %v415
        %v496 = vunpack.c.l.b16 %v416
        %v497 = vunpack.c.l.b16 %v417
        %v498 = vunpack.c.l.b16 %v418
        %v499 = vunpack.c.l.b16 %v419
        %v500 = vunpack.c.l.b16 %v420
        %v501 = vpack.c.b16 %v470, %v469
        %v502 = vpack.c.b16 %v472, %v471
        %v503 = vpack.c.b16 %v474, %v473
        %v504 = vpack.c.b16 %v476, %v475
        %v505 = vpack.c.b16 %v478, %v477
        %v506 = vpack.c.b16 %v480, %v479
        %v507 = vpack.c.b16 %v482, %v481
        %v508 = vpack.c.b16 %v484, %v483
        %v509 = vpack.c.b16 %v486, %v485
        %v510 = vpack.c.b16 %v488, %v487
        %v511 = vpack.c.b16 %v490, %v489
        %v512 = vpack.c.b16 %v492, %v491
        %v513 = vpack.c.b16 %v494, %v493
        %v514 = vpack.c.b16 %v496, %v495
        %v515 = vpack.c.b16 %v498, %v497
        %v516 = vpack.c.b16 %v500, %v499
        %v549 = vunpack.c.l.b16 %v421
        %v550 = vunpack.c.l.b16 %v422
        %v551 = vunpack.c.l.b16 %v423
        %v552 = vunpack.c.l.b16 %v424
        %v553 = vunpack.c.l.b16 %v425
        %v554 = vunpack.c.l.b16 %v426
        %v555 = vunpack.c.l.b16 %v427
        %v556 = vunpack.c.l.b16 %v428
        %v557 = vunpack.c.l.b16 %v429
        %v558 = vunpack.c.l.b16 %v430
        %v559 = vunpack.c.l.b16 %v431
        %v560 = vunpack.c.l.b16 %v432
        %v561 = vunpack.c.l.b16 %v433
        %v562 = vunpack.c.l.b16 %v434
        %v563 = vunpack.c.l.b16 %v435
        %v564 = vunpack.c.l.b16 %v436
        %v565 = vpack.c.b16 %v550, %v549
        %v566 = vpack.c.b16 %v552, %v551
        %v567 = vpack.c.b16 %v554, %v553
        %v568 = vpack.c.b16 %v556, %v555
        %v569 = vpack.c.b16 %v558, %v557
        %v570 = vpack.c.b16 %v560, %v559
        %v571 = vpack.c.b16 %v562, %v561
        %v572 = vpack.c.b16 %v564, %v563
        %581 = vmatprep.subr.bf16.mxu0 0
        %582 = vmatpush1.bf16.msra.mxu0 %v565
        %583 = vmatprep.subr.bf16.mxu0 0
        %584 = vmatpush1.bf16.msra.mxu0 %v566
        %585 = vmatprep.subr.bf16.mxu0 0
        %586 = vmatpush1.bf16.msra.mxu0 %v567
        %587 = vmatprep.subr.bf16.mxu0 0
        %588 = vmatpush1.bf16.msra.mxu0 %v568
        %589 = vmatprep.subr.bf16.mxu0 0
        %590 = vmatpush1.bf16.msra.mxu0 %v569
        %591 = vmatprep.subr.bf16.mxu0 0
        %592 = vmatpush1.bf16.msra.mxu0 %v570
        %593 = vmatprep.subr.bf16.mxu0 0
        %594 = vmatpush1.bf16.msra.mxu0 %v571
        %595 = vmatprep.subr.bf16.mxu0 0
        %596 = vmatpush1.bf16.msra.mxu0 %v572
        %597 = vmatprep.subr.bf16.mxu0 0
        %598 = vmatpush1.bf16.msra.mxu0 0
        %599 = vmatprep.subr.bf16.mxu0 0
        %600 = vmatpush1.bf16.msra.mxu0 0
        %601 = vmatprep.subr.bf16.mxu0 0
        %602 = vmatpush1.bf16.msra.mxu0 0
        %603 = vmatprep.subr.bf16.mxu0 0
        %604 = vmatpush1.bf16.msra.mxu0 0
        %605 = vmatprep.subr.bf16.mxu0 0
        %606 = vmatpush1.bf16.msra.mxu0 0
        %607 = vmatprep.subr.bf16.mxu0 0
        %608 = vmatpush1.bf16.msra.mxu0 0
        %609 = vmatprep.subr.bf16.mxu0 0
        %610 = vmatpush1.bf16.msra.mxu0 0
        %611 = vmatprep.subr.bf16.mxu0 0
        %612 = vmatpush1.bf16.msra.mxu0 0
        %613 = vmatprep.mubr.bf16.mxu0 0
        %614 = vmatmul.mubr.bf16.gmra.mrb[0].mxu0 %v501
        %v615 = vpop.f32.mrb[0].mxu0
        %v616 = vadd.f32 0.0, %v615
        %v617 = vpop.f32.mrb[0].mxu0
        %v618 = vpop.f32.mrb[0].mxu0
        %v619 = vadd.f32 0.0, %v618
        %v620 = vpop.f32.mrb[0].mxu0
        %621 = vmatprep.mubr.bf16.mxu0 0
        %622 = vmatmul.mubr.bf16.gmra.mrb[0].mxu0 %v502
        %v623 = vpop.f32.mrb[0].mxu0
        %v624 = vadd.f32 0.0, %v623
        %v625 = vpop.f32.mrb[0].mxu0
        %v626 = vpop.f32.mrb[0].mxu0
        %v627 = vadd.f32 0.0, %v626
        %v628 = vpop.f32.mrb[0].mxu0
        %629 = vmatprep.mubr.bf16.mxu0 0
        %630 = vmatmul.mubr.bf16.gmra.mrb[0].mxu0 %v503
        %v631 = vpop.f32.mrb[0].mxu0
        %v632 = vadd.f32 0.0, %v631
        %v633 = vpop.f32.mrb[0].mxu0
        %v634 = vpop.f32.mrb[0].mxu0
        %v635 = vadd.f32 0.0, %v634
        %v636 = vpop.f32.mrb[0].mxu0
        %637 = vmatprep.mubr.bf16.mxu0 0
        %638 = vmatmul.mubr.bf16.gmra.mrb[0].mxu0 %v504
        %v639 = vpop.f32.mrb[0].mxu0
        %v640 = vadd.f32 0.0, %v639
        %v641 = vpop.f32.mrb[0].mxu0
        %v642 = vpop.f32.mrb[0].mxu0
        %v643 = vadd.f32 0.0, %v642
        %v644 = vpop.f32.mrb[0].mxu0
        %645 = vmatprep.mubr.bf16.mxu0 0
        %646 = vmatmul.mubr.bf16.gmra.mrb[0].mxu0 %v505
        %v647 = vpop.f32.mrb[0].mxu0
        %v648 = vadd.f32 0.0, %v647
        %v649 = vpop.f32.mrb[0].mxu0
        %v650 = vpop.f32.mrb[0].mxu0
        %v651 = vadd.f32 0.0, %v650
        %v652 = vpop.f32.mrb[0].mxu0
        %653 = vmatprep.mubr.bf16.mxu0 0
        %654 = vmatmul.mubr.bf16.gmra.mrb[0].mxu0 %v506
        %v655 = vpop.f32.mrb[0].mxu0
        %v656 = vadd.f32 0.0, %v655
        %v657 = vpop.f32.mrb[0].mxu0
        %v658 = vpop.f32.mrb[0].mxu0
        %v659 = vadd.f32 0.0, %v658
        %v660 = vpop.f32.mrb[0].mxu0
        %661 = vmatprep.mubr.bf16.mxu0 0
        %662 = vmatmul.mubr.bf16.gmra.mrb[0].mxu0 %v507
        %v663 = vpop.f32.mrb[0].mxu0
        %v664 = vadd.f32 0.0, %v663
        %v665 = vpop.f32.mrb[0].mxu0
        %v666 = vpop.f32.mrb[0].mxu0
        %v667 = vadd.f32 0.0, %v666
        %v668 = vpop.f32.mrb[0].mxu0
        %669 = vmatprep.mubr.bf16.mxu0 0
        %670 = vmatmul.mubr.bf16.gmra.mrb[0].mxu0 %v508
        %v671 = vpop.f32.mrb[0].mxu0
        %v672 = vadd.f32 0.0, %v671
        %v673 = vpop.f32.mrb[0].mxu0
        %v674 = vpop.f32.mrb[0].mxu0
        %v675 = vadd.f32 0.0, %v674
        %v676 = vpop.f32.mrb[0].mxu0
        %677 = vmatprep.mubr.bf16.mxu0 0
        %678 = vmatmul.mubr.bf16.gmra.mrb[0].mxu0 %v509
        %v679 = vpop.f32.mrb[0].mxu0
        %v680 = vadd.f32 0.0, %v679
        %v681 = vpop.f32.mrb[0].mxu0
        %v682 = vpop.f32.mrb[0].mxu0
        %v683 = vadd.f32 0.0, %v682
        %v684 = vpop.f32.mrb[0].mxu0
        %685 = vmatprep.mubr.bf16.mxu0 0
        %686 = vmatmul.mubr.bf16.gmra.mrb[0].mxu0 %v510
        %v687 = vpop.f32.mrb[0].mxu0
        %v688 = vadd.f32 0.0, %v687
        %v689 = vpop.f32.mrb[0].mxu0
        %v690 = vpop.f32.mrb[0].mxu0
        %v691 = vadd.f32 0.0, %v690
        %v692 = vpop.f32.mrb[0].mxu0
        %693 = vmatprep.mubr.bf16.mxu0 0
        %694 = vmatmul.mubr.bf16.gmra.mrb[0].mxu0 %v511
        %v695 = vpop.f32.mrb[0].mxu0
        %v696 = vadd.f32 0.0, %v695
        %v697 = vpop.f32.mrb[0].mxu0
        %v698 = vpop.f32.mrb[0].mxu0
        %v699 = vadd.f32 0.0, %v698
        %v700 = vpop.f32.mrb[0].mxu0
        %701 = vmatprep.mubr.bf16.mxu0 0
        %702 = vmatmul.mubr.bf16.gmra.mrb[0].mxu0 %v512
        %v703 = vpop.f32.mrb[0].mxu0
        %v704 = vadd.f32 0.0, %v703
        %v705 = vpop.f32.mrb[0].mxu0
        %v706 = vpop.f32.mrb[0].mxu0
        %v707 = vadd.f32 0.0, %v706
        %v708 = vpop.f32.mrb[0].mxu0
        %709 = vmatprep.mubr.bf16.mxu0 0
        %710 = vmatmul.mubr.bf16.gmra.mrb[0].mxu0 %v513
        %v711 = vpop.f32.mrb[0].mxu0
        %v712 = vadd.f32 0.0, %v711
        %v713 = vpop.f32.mrb[0].mxu0
        %v714 = vpop.f32.mrb[0].mxu0
        %v715 = vadd.f32 0.0, %v714
        %v716 = vpop.f32.mrb[0].mxu0
        %717 = vmatprep.mubr.bf16.mxu0 0
        %718 = vmatmul.mubr.bf16.gmra.mrb[0].mxu0 %v514
        %v719 = vpop.f32.mrb[0].mxu0
        %v720 = vadd.f32 0.0, %v719
        %v721 = vpop.f32.mrb[0].mxu0
        %v722 = vpop.f32.mrb[0].mxu0
        %v723 = vadd.f32 0.0, %v722
        %v724 = vpop.f32.mrb[0].mxu0
        %725 = vmatprep.mubr.bf16.mxu0 0
        %726 = vmatmul.mubr.bf16.gmra.mrb[0].mxu0 %v515
        %v727 = vpop.f32.mrb[0].mxu0
        %v728 = vadd.f32 0.0, %v727
        %v729 = vpop.f32.mrb[0].mxu0
        %v730 = vpop.f32.mrb[0].mxu0
        %v731 = vadd.f32 0.0, %v730
        %v732 = vpop.f32.mrb[0].mxu0
        %733 = vmatprep.mubr.bf16.mxu0 0
        %734 = vmatmul.mubr.bf16.gmra.mrb[0].mxu0 %v516
        %v735 = vpop.f32.mrb[0].mxu0
        %v736 = vadd.f32 0.0, %v735
        %v737 = vpop.f32.mrb[0].mxu0
        %v738 = vpop.f32.mrb[0].mxu0
        %v739 = vadd.f32 0.0, %v738
        %v740 = vpop.f32.mrb[0].mxu0
        %741 = vdwg.mxu0
        %v742 = vmax.f32 %v616, 0.0
        %v743 = vmax.f32 %v619, 0.0
        %v744 = vmax.f32 %v624, 0.0
        %v745 = vmax.f32 %v627, 0.0
        %v746 = vmax.f32 %v632, 0.0
        %v747 = vmax.f32 %v635, 0.0
        %v748 = vmax.f32 %v640, 0.0
        %v749 = vmax.f32 %v643, 0.0
        %v750 = vmax.f32 %v648, 0.0
        %v751 = vmax.f32 %v651, 0.0
        %v752 = vmax.f32 %v656, 0.0
        %v753 = vmax.f32 %v659, 0.0
        %v754 = vmax.f32 %v664, 0.0
        %v755 = vmax.f32 %v667, 0.0
        %v756 = vmax.f32 %v672, 0.0
        %v757 = vmax.f32 %v675, 0.0
        %v758 = vmax.f32 %v680, 0.0
        %v759 = vmax.f32 %v683, 0.0
        %v760 = vmax.f32 %v688, 0.0
        %v761 = vmax.f32 %v691, 0.0
        %v762 = vmax.f32 %v696, 0.0
        %v763 = vmax.f32 %v699, 0.0
        %v764 = vmax.f32 %v704, 0.0
        %v765 = vmax.f32 %v707, 0.0
        %v766 = vmax.f32 %v712, 0.0
        %v767 = vmax.f32 %v715, 0.0
        %v768 = vmax.f32 %v720, 0.0
        %v769 = vmax.f32 %v723, 0.0
        %v770 = vmax.f32 %v728, 0.0
        %v771 = vmax.f32 %v731, 0.0
        %v772 = vmax.f32 %v736, 0.0
        %v773 = vmax.f32 %v739, 0.0
        %v774 = vld [vmem:[#allocation2] sm:$0x3]
        %v775 = vadd.f32 %v742, %v743
        %v776 = vadd.f32 %v775, %v744
        %v777 = vadd.f32 %v776, %v745
        %v778 = vadd.f32 %v777, %v746
        %v779 = vadd.f32 %v778, %v747
        %v780 = vadd.f32 %v779, %v748
        %v781 = vadd.f32 %v780, %v749
        %v782 = vadd.f32 %v781, %v750
        %v783 = vadd.f32 %v782, %v751
        %v784 = vadd.f32 %v783, %v752
        %v785 = vadd.f32 %v784, %v753
        %v786 = vadd.f32 %v785, %v754
        %v787 = vadd.f32 %v786, %v755
        %v788 = vadd.f32 %v787, %v756
        %v789 = vadd.f32 %v788, %v757
        %v790 = vrot.slane %v789, 4
        %v791 = vadd.f32 %v789, %v790
        %v792 = vrot.slane %v791, 2
        %v793 = vadd.f32 %v791, %v792
        %v794 = vrot.slane %v793, 1
        %v795 = vadd.f32 %v793, %v794
        %v796 = vadd.f32 %v758, %v759
        %v797 = vadd.f32 %v796, %v760
        %v798 = vadd.f32 %v797, %v761
        %v799 = vadd.f32 %v798, %v762
        %v800 = vadd.f32 %v799, %v763
        %v801 = vadd.f32 %v800, %v764
        %v802 = vadd.f32 %v801, %v765
        %v803 = vadd.f32 %v802, %v766
        %v804 = vadd.f32 %v803, %v767
        %v805 = vadd.f32 %v804, %v768
        %v806 = vadd.f32 %v805, %v769
        %v807 = vadd.f32 %v806, %v770
        %v808 = vadd.f32 %v807, %v771
        %v809 = vadd.f32 %v808, %v772
        %v810 = vadd.f32 %v809, %v773
        %v811 = vrot.slane %v810, 4
        %v812 = vadd.f32 %v810, %v811
        %v813 = vrot.slane %v812, 2
        %v814 = vadd.f32 %v812, %v813
        %v815 = vrot.slane %v814, 1
        %v816 = vadd.f32 %v814, %v815
        %vm819 = vcmask 1041409
        %v820 = vsel %vm819, %v816, %v795
        %v822 = vadd.f32 %v774, %v820
        %823 = vst [vmem:[#allocation2] sm:$0x3] %v822
        %p824 = scmp.eq.s32.totalorder %s20, 1
        // Predicated region
        $region82: #{siamese_arm_forward.2} parent=72 // pred_check
          %p825 = pneg %p824
        $region83: #{siamese_arm_forward.2} parent=72 // pred_check_branch
          %827 = sbr.rel (%p825) target = $region85
        $region84: #{siamese_arm_forward.2} parent=72 // pred_region
          %v828 = vld [vmem:[#allocation2] sm:$0x3]
          %v829 = vmul.f32 %v828, 0.00390625
          %v830 = vpack.c.bf16 %v829, %v829
          %v831 = vld [vmem:[%s2] sm:$0xff]
          %v832 = vld [vmem:[%s2 + $0x8] sm:$0xff]
          %v833 = vld [vmem:[%s2 + $0x10] sm:$0xff]
          %v834 = vld [vmem:[%s2 + $0x18] sm:$0xff]
          %v835 = vld [vmem:[%s2 + $0x20] sm:$0xff]
          %v836 = vld [vmem:[%s2 + $0x28] sm:$0xff]
          %v837 = vld [vmem:[%s2 + $0x30] sm:$0xff]
          %v838 = vld [vmem:[%s2 + $0x38] sm:$0xff]
          %v839 = vld [vmem:[%s2 + $0x40] sm:$0xff]
          %v840 = vld [vmem:[%s2 + $0x48] sm:$0xff]
          %v841 = vld [vmem:[%s2 + $0x50] sm:$0xff]
          %v842 = vld [vmem:[%s2 + $0x58] sm:$0xff]
          %v843 = vld [vmem:[%s2 + $0x60] sm:$0xff]
          %v844 = vld [vmem:[%s2 + $0x68] sm:$0xff]
          %v845 = vld [vmem:[%s2 + $0x70] sm:$0xff]
          %v846 = vld [vmem:[%s2 + $0x78] sm:$0xff]
          %v847 = vld [vmem:[%s2 + $0x80] sm:$0xff]
          %v848 = vld [vmem:[%s2 + $0x88] sm:$0xff]
          %v849 = vld [vmem:[%s2 + $0x90] sm:$0xff]
          %v850 = vld [vmem:[%s2 + $0x98] sm:$0xff]
          %v851 = vld [vmem:[%s2 + $0xa0] sm:$0xff]
          %v852 = vld [vmem:[%s2 + $0xa8] sm:$0xff]
          %v853 = vld [vmem:[%s2 + $0xb0] sm:$0xff]
          %v854 = vld [vmem:[%s2 + $0xb8] sm:$0xff]
          %v855 = vld [vmem:[%s2 + $0xc0] sm:$0xff]
          %v856 = vld [vmem:[%s2 + $0xc8] sm:$0xff]
          %v857 = vld [vmem:[%s2 + $0xd0] sm:$0xff]
          %v858 = vld [vmem:[%s2 + $0xd8] sm:$0xff]
          %v859 = vld [vmem:[%s2 + $0xe0] sm:$0xff]
          %v860 = vld [vmem:[%s2 + $0xe8] sm:$0xff]
          %v861 = vld [vmem:[%s2 + $0xf0] sm:$0xff]
          %v862 = vld [vmem:[%s2 + $0xf8] sm:$0xff]
          %v863 = vld [vmem:[%s3] sm:$0xf]
          %v865 = vlaneseq
          %v866 = vshrl.u32 %v865, 7
          %v867 = vsub.s32 0, %v866
          %v868 = vrot.slane %v863, %v867
          %v869 = vlaneseq
          %v870 = vshrl.u32 %v869, 7
          %v871 = vsub.s32 1, %v870
          %v872 = vrot.slane %v863, %v871
          %v873 = vlaneseq
          %v874 = vshrl.u32 %v873, 7
          %v875 = vsub.s32 2, %v874
          %v876 = vrot.slane %v863, %v875
          %v877 = vlaneseq
          %v878 = vshrl.u32 %v877, 7
          %v879 = vsub.s32 3, %v878
          %v880 = vrot.slane %v863, %v879
          %v917 = vunpack.c.l.b16 %v831
          %v918 = vunpack.c.h.b16 %v831
          %v919 = vunpack.c.l.b16 %v832
          %v920 = vunpack.c.h.b16 %v832
          %v921 = vunpack.c.l.b16 %v833
          %v922 = vunpack.c.h.b16 %v833
          %v923 = vunpack.c.l.b16 %v834
          %v924 = vunpack.c.h.b16 %v834
          %v925 = vunpack.c.l.b16 %v835
          %v926 = vunpack.c.h.b16 %v835
          %v927 = vunpack.c.l.b16 %v836
          %v928 = vunpack.c.h.b16 %v836
          %v929 = vunpack.c.l.b16 %v837
          %v930 = vunpack.c.h.b16 %v837
          %v931 = vunpack.c.l.b16 %v838
          %v932 = vunpack.c.h.b16 %v838
          %v933 = vunpack.c.l.b16 %v839
          %v934 = vunpack.c.h.b16 %v839
          %v935 = vunpack.c.l.b16 %v840
          %v936 = vunpack.c.h.b16 %v840
          %v937 = vunpack.c.l.b16 %v841
          %v938 = vunpack.c.h.b16 %v841
          %v939 = vunpack.c.l.b16 %v842
          %v940 = vunpack.c.h.b16 %v842
          %v941 = vunpack.c.l.b16 %v843
          %v942 = vunpack.c.h.b16 %v843
          %v943 = vunpack.c.l.b16 %v844
          %v944 = vunpack.c.h.b16 %v844
          %v945 = vunpack.c.l.b16 %v845
          %v946 = vunpack.c.h.b16 %v845
          %v947 = vunpack.c.l.b16 %v846
          %v948 = vunpack.c.h.b16 %v846
          %v949 = vunpack.c.l.b16 %v847
          %v950 = vunpack.c.h.b16 %v847
          %v951 = vunpack.c.l.b16 %v848
          %v952 = vunpack.c.h.b16 %v848
          %v953 = vunpack.c.l.b16 %v849
          %v954 = vunpack.c.h.b16 %v849
          %v955 = vunpack.c.l.b16 %v850
          %v956 = vunpack.c.h.b16 %v850
          %v957 = vunpack.c.l.b16 %v851
          %v958 = vunpack.c.h.b16 %v851
          %v959 = vunpack.c.l.b16 %v852
          %v960 = vunpack.c.h.b16 %v852
          %v961 = vunpack.c.l.b16 %v853
          %v962 = vunpack.c.h.b16 %v853
          %v963 = vunpack.c.l.b16 %v854
          %v964 = vunpack.c.h.b16 %v854
          %v965 = vunpack.c.l.b16 %v855
          %v966 = vunpack.c.h.b16 %v855
          %v967 = vunpack.c.l.b16 %v856
          %v968 = vunpack.c.h.b16 %v856
          %v969 = vunpack.c.l.b16 %v857
          %v970 = vunpack.c.h.b16 %v857
          %v971 = vunpack.c.l.b16 %v858
          %v972 = vunpack.c.h.b16 %v858
          %v973 = vunpack.c.l.b16 %v859
          %v974 = vunpack.c.h.b16 %v859
          %v975 = vunpack.c.l.b16 %v860
          %v976 = vunpack.c.h.b16 %v860
          %v977 = vunpack.c.l.b16 %v861
          %v978 = vunpack.c.h.b16 %v861
          %v979 = vunpack.c.l.b16 %v862
          %v980 = vunpack.c.h.b16 %v862
          %v981 = vpack.c.b16 %v921, %v917
          %v982 = vpack.c.b16 %v922, %v918
          %v983 = vpack.c.b16 %v923, %v919
          %v984 = vpack.c.b16 %v924, %v920
          %v985 = vpack.c.b16 %v929, %v925
          %v986 = vpack.c.b16 %v930, %v926
          %v987 = vpack.c.b16 %v931, %v927
          %v988 = vpack.c.b16 %v932, %v928
          %v989 = vpack.c.b16 %v937, %v933
          %v990 = vpack.c.b16 %v938, %v934
          %v991 = vpack.c.b16 %v939, %v935
          %v992 = vpack.c.b16 %v940, %v936
          %v993 = vpack.c.b16 %v945, %v941
          %v994 = vpack.c.b16 %v946, %v942
          %v995 = vpack.c.b16 %v947, %v943
          %v996 = vpack.c.b16 %v948, %v944
          %v997 = vpack.c.b16 %v953, %v949
          %v998 = vpack.c.b16 %v954, %v950
          %v999 = vpack.c.b16 %v955, %v951
          %v1000 = vpack.c.b16 %v956, %v952
          %v1001 = vpack.c.b16 %v961, %v957
          %v1002 = vpack.c.b16 %v962, %v958
          %v1003 = vpack.c.b16 %v963, %v959
          %v1004 = vpack.c.b16 %v964, %v960
          %v1005 = vpack.c.b16 %v969, %v965
          %v1006 = vpack.c.b16 %v970, %v966
          %v1007 = vpack.c.b16 %v971, %v967
          %v1008 = vpack.c.b16 %v972, %v968
          %v1009 = vpack.c.b16 %v977, %v973
          %v1010 = vpack.c.b16 %v978, %v974
          %v1011 = vpack.c.b16 %v979, %v975
          %v1012 = vpack.c.b16 %v980, %v976
          %1045 = vmatprep.subr.bf16.mxu0 %v982
          %1046 = vmatpush1.bf16.msra.mxu0 %v981
          %1047 = vmatprep.subr.bf16.mxu0 %v986
          %1048 = vmatpush1.bf16.msra.mxu0 %v985
          %1049 = vmatprep.subr.bf16.mxu0 %v990
          %1050 = vmatpush1.bf16.msra.mxu0 %v989
          %1051 = vmatprep.subr.bf16.mxu0 %v994
          %1052 = vmatpush1.bf16.msra.mxu0 %v993
          %1053 = vmatprep.subr.bf16.mxu0 %v998
          %1054 = vmatpush1.bf16.msra.mxu0 %v997
          %1055 = vmatprep.subr.bf16.mxu0 %v1002
          %1056 = vmatpush1.bf16.msra.mxu0 %v1001
          %1057 = vmatprep.subr.bf16.mxu0 %v1006
          %1058 = vmatpush1.bf16.msra.mxu0 %v1005
          %1059 = vmatprep.subr.bf16.mxu0 %v1010
          %1060 = vmatpush1.bf16.msra.mxu0 %v1009
          %1061 = vmatprep.subr.bf16.mxu0 0
          %1062 = vmatpush1.bf16.msra.mxu0 0
          %1063 = vmatprep.subr.bf16.mxu0 0
          %1064 = vmatpush1.bf16.msra.mxu0 0
          %1065 = vmatprep.subr.bf16.mxu0 0
          %1066 = vmatpush1.bf16.msra.mxu0 0
          %1067 = vmatprep.subr.bf16.mxu0 0
          %1068 = vmatpush1.bf16.msra.mxu0 0
          %1069 = vmatprep.subr.bf16.mxu0 0
          %1070 = vmatpush1.bf16.msra.mxu0 0
          %1071 = vmatprep.subr.bf16.mxu0 0
          %1072 = vmatpush1.bf16.msra.mxu0 0
          %1073 = vmatprep.subr.bf16.mxu0 0
          %1074 = vmatpush1.bf16.msra.mxu0 0
          %1075 = vmatprep.subr.bf16.mxu0 0
          %1076 = vmatpush1.bf16.msra.mxu0 0
          %1077 = vmatprep.mubr.bf16.mxu0 0
          %1078 = vmatmul.mubr.bf16.gmra.mrb[0].mxu0 %v830
          %v1079 = vpop.f32.mrb[0].mxu0
          %v1080 = vadd.f32 %v868, %v1079
          %v1081 = vpop.f32.mrb[0].mxu0
          %v1082 = vadd.f32 %v872, %v1081
          %v1083 = vpop.f32.mrb[0].mxu0
          %v1084 = vpop.f32.mrb[0].mxu0
          %1085 = vdwg.mxu0
          %1086 = vmatprep.subr.bf16.mxu0 %v984
          %1087 = vmatpush1.bf16.msra.mxu0 %v983
          %1088 = vmatprep.subr.bf16.mxu0 %v988
          %1089 = vmatpush1.bf16.msra.mxu0 %v987
          %1090 = vmatprep.subr.bf16.mxu0 %v992
          %1091 = vmatpush1.bf16.msra.mxu0 %v991
          %1092 = vmatprep.subr.bf16.mxu0 %v996
          %1093 = vmatpush1.bf16.msra.mxu0 %v995
          %1094 = vmatprep.subr.bf16.mxu0 %v1000
          %1095 = vmatpush1.bf16.msra.mxu0 %v999
          %1096 = vmatprep.subr.bf16.mxu0 %v1004
          %1097 = vmatpush1.bf16.msra.mxu0 %v1003
          %1098 = vmatprep.subr.bf16.mxu0 %v1008
          %1099 = vmatpush1.bf16.msra.mxu0 %v1007
          %1100 = vmatprep.subr.bf16.mxu0 %v1012
          %1101 = vmatpush1.bf16.msra.mxu0 %v1011
          %1102 = vmatprep.subr.bf16.mxu0 0
          %1103 = vmatpush1.bf16.msra.mxu0 0
          %1104 = vmatprep.subr.bf16.mxu0 0
          %1105 = vmatpush1.bf16.msra.mxu0 0
          %1106 = vmatprep.subr.bf16.mxu0 0
          %1107 = vmatpush1.bf16.msra.mxu0 0
          %1108 = vmatprep.subr.bf16.mxu0 0
          %1109 = vmatpush1.bf16.msra.mxu0 0
          %1110 = vmatprep.subr.bf16.mxu0 0
          %1111 = vmatpush1.bf16.msra.mxu0 0
          %1112 = vmatprep.subr.bf16.mxu0 0
          %1113 = vmatpush1.bf16.msra.mxu0 0
          %1114 = vmatprep.subr.bf16.mxu0 0
          %1115 = vmatpush1.bf16.msra.mxu0 0
          %1116 = vmatprep.subr.bf16.mxu0 0
          %1117 = vmatpush1.bf16.msra.mxu0 0
          %1118 = vmatprep.mubr.bf16.mxu0 0
          %1119 = vmatmul.mubr.bf16.gmra.mrb[0].mxu0 %v830
          %v1120 = vpop.f32.mrb[0].mxu0
          %v1121 = vadd.f32 %v876, %v1120
          %v1122 = vpop.f32.mrb[0].mxu0
          %v1123 = vadd.f32 %v880, %v1122
          %v1124 = vpop.f32.mrb[0].mxu0
          %v1125 = vpop.f32.mrb[0].mxu0
          %1126 = vdwg.mxu0
          %v1131 = vcombine.low %v1080, %v1082
          %v1132 = vcombine.low %v1121, %v1123
          %v1134 = vunpack.c.l.s4 1983009808
          %v1135 = vunpack.c.0.s8 %v1134
          %v1136 = vlaneseq
          %v1137 = vshrl.u32 %v1136, 7
          %v1138 = vsub.s32 %v1135, %v1137
          %v1139 = vrot.slane %v1131, %v1138
          %v1141 = vunpack.c.l.s4 1983009808
          %v1142 = vunpack.c.0.s8 %v1141
          %v1143 = vlaneseq
          %v1144 = vshrl.u32 %v1143, 7
          %v1145 = vsub.s32 %v1142, %v1144
          %v1146 = vrot.slane %v1132, %v1145
          %v1147 = vcombine.low %v1139, %v1146
          %1149 = vst [vmem:[%s382] sm:$0xff] %v1147
        $region85: #{siamese_arm_forward.2} parent=72 // pred_fallthru
          _
        %p1150 = scmp.lt.s32.totalorder %s19, 0
        %s1151 = scalar_select %p1150, %s19, 0
        %s1152 = smul.addr %s1151, 4
        %s1153 = smul.addr %s1152, 2
        %s1154 = scalar_lea.vmem %s4, %s1153
        // Predicated region
        $region86: #{siamese_arm_forward.2} parent=72 // pred_check
          %p1155 = pneg %p136
        $region87: #{siamese_arm_forward.2} parent=72 // pred_check_branch
          %1157 = sbr.rel (%p1155) target = $region89
        $region88: #{siamese_arm_forward.2} parent=72 // pred_region
          _
        $region89: #{siamese_arm_forward.2} parent=72 // pred_fallthru
          _
        // Predicated region
        $region90: #{siamese_arm_forward.2} parent=72 // pred_check
          %p1158 = pneg %p136
        $region91: #{siamese_arm_forward.2} parent=72 // pred_check_branch
          %1160 = sbr.rel (%p1158) target = $region93
        $region92: #{siamese_arm_forward.2} parent=72 // pred_region
          %p1161 = scmp.lt.s32.totalorder %s19, 0
          %s1162 = scalar_select %p1161, %s19, 0
          %s1163 = smul.addr %s1162, 4
          %s1164 = smul.addr %s1163, 2
          %s1165 = scalar_lea.vmem %s4, %s1164
        $region93: #{siamese_arm_forward.2} parent=72 // pred_fallthru
          _
      $region73: #{siamese_arm_forward.2} parent=5 // pred_fallthru
        _
      %p1166 = scmp.le.s32.totalorder 2, %s10
      // Predicated region
      $region94: #{siamese_arm_forward.2} parent=5 // pred_check
        %p1167 = pneg %p1166
      $region95: #{siamese_arm_forward.2} parent=5 // pred_check_branch
        %1169 = sbr.rel (%p1167) target = $region97
      $region96: #{siamese_arm_forward.2} parent=5 // pred_region
        %s1170 = ssub.s32 %s10, 2
      $region97: #{siamese_arm_forward.2} parent=5 // pred_fallthru
        _
    $region6: #{siamese_arm_forward.2} parent=1 // loop_footer
      %s14 = sadd.s32 1, %s10
    $region7: #{siamese_arm_forward.2} parent=1 // loop_footer_branch
      %9 = sbr.rel target = $region3
    $region8: #{siamese_arm_forward.2} parent=1 // loop_exit
      _

// kernel: siamese_arm_forward.3
$region0: #{siamese_arm_forward.3}
  #allocation0 [shape = 'u32[]', space=smem, size = 0x4, offset = 0x4, fixed_abs, tag = 'smem constant byte address 0x4 - core index']
  #allocation1 [shape = 'u32[144,128]{1,0:T(1,128)}', space=vmem, size = 0x12000, scoped, tag = 'internal scratch']
  %s0 = inlined_call_operand.vmem [shape: f32[2,512], index: 0, kind: input, shape index: {}]
  %s1 = inlined_call_operand.vmem [shape: bf16[512,512], index: 1, kind: input, shape index: {}]
  %s2 = inlined_call_operand.vmem [shape: f32[1,512], index: 2, kind: input, shape index: {}]
  %s3 = inlined_call_operand.vmem [shape: f32[1,512], index: 3, kind: input, shape index: {}]
  %s4 = inlined_call_operand.vmem [shape: bf16[512,128], index: 4, kind: input, shape index: {}]
  %s5 = inlined_call_operand.vmem [shape: f32[1,128], index: 5, kind: input, shape index: {}]
  %s6 = inlined_call_operand.vmem [shape: bf16[128,128], index: 6, kind: input, shape index: {}]
  %s7 = inlined_call_operand.vmem [shape: f32[1,128], index: 7, kind: input, shape index: {}]
  %s8 = inlined_call_operand.vmem [shape: f32[1,128], index: 8, kind: input, shape index: {}]
  %s9 = inlined_call_operand.vmem [shape: bf16[128,128], index: 9, kind: input, shape index: {}]
  %s10 = inlined_call_operand.vmem [shape: f32[1,128], index: 10, kind: input, shape index: {}]
  %s11 = inlined_call_operand.hbm [shape: f32[2,128], index: 11, kind: output, shape index: {0}]
  %s12 = inlined_call_operand.hbm [shape: f32[2,128], index: 12, kind: output, shape index: {1}]
  %13 = xla_tuple %s11, %s12
  %s14 = sld [smem:[#allocation0]]
  $region62: #{siamese_arm_forward.3} parent=0
    _
  %s16 = ssub.s32 1, %s14
  %s17 = scalar_select 0, %s16, %s14
  $region1: #{siamese_arm_forward.3} parent=0
    #allocation2 [shape = 'u8[1024]{0}', space=vmem, size = 0x400, scoped, tag = 'output window, operand 0, single buffered']
    #allocation3 [shape = 's32[1]{0}', space=sflag, size = 0x4, scoped, tag = 'scoped memory for siamese_arm_forward.3']
    #allocation4 [shape = 'u8[1024]{0}', space=vmem, size = 0x400, scoped, tag = 'output window, operand 1, single buffered']
    #allocation5 [shape = 's32[1]{0}', space=sflag, size = 0x4, scoped, tag = 'scoped memory for siamese_arm_forward.3']
    %18 = vsyncpa [#allocation3], 0
    %19 = vsyncpa [#allocation5], 0
    // Predicated region
    $region2: #{siamese_arm_forward.3} parent=1 // pred_check
      _
    $region3: #{siamese_arm_forward.3} parent=1 // pred_check_branch
      %21 = sbr.rel (0) target = $region5
    $region4: #{siamese_arm_forward.3} parent=1 // pred_region
      _
    $region5: #{siamese_arm_forward.3} parent=1 // pred_fallthru
      _
    // Predicated region
    $region6: #{siamese_arm_forward.3} parent=1 // pred_check
      _
    $region7: #{siamese_arm_forward.3} parent=1 // pred_check_branch
      %23 = sbr.rel (0) target = $region9
    $region8: #{siamese_arm_forward.3} parent=1 // pred_region
      _
    $region9: #{siamese_arm_forward.3} parent=1 // pred_fallthru
      _
    // Predicated region
    $region10: #{siamese_arm_forward.3} parent=1 // pred_check
      _
    $region11: #{siamese_arm_forward.3} parent=1 // pred_check_branch
      %25 = sbr.rel (0) target = $region13
    $region12: #{siamese_arm_forward.3} parent=1 // pred_region
      _
    $region13: #{siamese_arm_forward.3} parent=1 // pred_fallthru
      _
    // Predicated region
    $region14: #{siamese_arm_forward.3} parent=1 // pred_check
      _
    $region15: #{siamese_arm_forward.3} parent=1 // pred_check_branch
      %27 = sbr.rel (0) target = $region17
    $region16: #{siamese_arm_forward.3} parent=1 // pred_region
      _
    $region17: #{siamese_arm_forward.3} parent=1 // pred_fallthru
      _
    // Predicated region
    $region18: #{siamese_arm_forward.3} parent=1 // pred_check
      _
    $region19: #{siamese_arm_forward.3} parent=1 // pred_check_branch
      %29 = sbr.rel (0) target = $region21
    $region20: #{siamese_arm_forward.3} parent=1 // pred_region
      _
    $region21: #{siamese_arm_forward.3} parent=1 // pred_fallthru
      _
    // Predicated region
    $region22: #{siamese_arm_forward.3} parent=1 // pred_check
      _
    $region23: #{siamese_arm_forward.3} parent=1 // pred_check_branch
      %31 = sbr.rel (0) target = $region25
    $region24: #{siamese_arm_forward.3} parent=1 // pred_region
      _
    $region25: #{siamese_arm_forward.3} parent=1 // pred_fallthru
      _
    // Predicated region
    $region26: #{siamese_arm_forward.3} parent=1 // pred_check
      _
    $region27: #{siamese_arm_forward.3} parent=1 // pred_check_branch
      %33 = sbr.rel (0) target = $region29
    $region28: #{siamese_arm_forward.3} parent=1 // pred_region
      _
    $region29: #{siamese_arm_forward.3} parent=1 // pred_fallthru
      _
    // Predicated region
    $region30: #{siamese_arm_forward.3} parent=1 // pred_check
      _
    $region31: #{siamese_arm_forward.3} parent=1 // pred_check_branch
      %35 = sbr.rel (0) target = $region33
    $region32: #{siamese_arm_forward.3} parent=1 // pred_region
      _
    $region33: #{siamese_arm_forward.3} parent=1 // pred_fallthru
      _
    // Predicated region
    $region34: #{siamese_arm_forward.3} parent=1 // pred_check
      _
    $region35: #{siamese_arm_forward.3} parent=1 // pred_check_branch
      %37 = sbr.rel (0) target = $region37
    $region36: #{siamese_arm_forward.3} parent=1 // pred_region
      _
    $region37: #{siamese_arm_forward.3} parent=1 // pred_fallthru
      _
    // Predicated region
    $region38: #{siamese_arm_forward.3} parent=1 // pred_check
      _
    $region39: #{siamese_arm_forward.3} parent=1 // pred_check_branch
      %39 = sbr.rel (0) target = $region41
    $region40: #{siamese_arm_forward.3} parent=1 // pred_region
      _
    $region41: #{siamese_arm_forward.3} parent=1 // pred_fallthru
      _
    // Predicated region
    $region42: #{siamese_arm_forward.3} parent=1 // pred_check
      _
    $region43: #{siamese_arm_forward.3} parent=1 // pred_check_branch
      %41 = sbr.rel (0) target = $region45
    $region44: #{siamese_arm_forward.3} parent=1 // pred_region
      _
    $region45: #{siamese_arm_forward.3} parent=1 // pred_fallthru
      _
    %v43 = vld [vmem:[%s0] sm:$0xff]
    %v45 = vcombine.high %v43, %v43
    %v47 = vunpack.c.l.s4 1983009808
    %v48 = vunpack.c.0.s8 %v47
    %v49 = vlaneseq
    %v50 = vshrl.u32 %v49, 7
    %v51 = vsub.s32 %v48, %v50
    %v52 = vrot.slane %v43, %v51
    %v54 = vunpack.c.l.s4 1983009808
    %v55 = vunpack.c.0.s8 %v54
    %v56 = vlaneseq
    %v57 = vshrl.u32 %v56, 7
    %v58 = vsub.s32 %v55, %v57
    %v59 = vrot.slane %v45, %v58
    %v60 = vcombine.high %v52, %v52
    %v61 = vcombine.high %v59, %v59
    %v66 = vpack.c.bf16 %v52, %v52
    %v67 = vpack.c.bf16 %v60, %v60
    %v68 = vpack.c.bf16 %v59, %v59
    %v69 = vpack.c.bf16 %v61, %v61
    %v70 = vld [vmem:[%s1] sm:$0xff]
    %v71 = vld [vmem:[%s1 + $0x8] sm:$0xff]
    %v72 = vld [vmem:[%s1 + $0x10] sm:$0xff]
    %v73 = vld [vmem:[%s1 + $0x18] sm:$0xff]
    %v74 = vld [vmem:[%s1 + $0x20] sm:$0xff]
    %v75 = vld [vmem:[%s1 + $0x28] sm:$0xff]
    %v76 = vld [vmem:[%s1 + $0x30] sm:$0xff]
    %v77 = vld [vmem:[%s1 + $0x38] sm:$0xff]
    %v78 = vld [vmem:[%s1 + $0x40] sm:$0xff]
    %v79 = vld [vmem:[%s1 + $0x48] sm:$0xff]
    %v80 = vld [vmem:[%s1 + $0x50] sm:$0xff]
    %v81 = vld [vmem:[%s1 + $0x58] sm:$0xff]
    %v82 = vld [vmem:[%s1 + $0x60] sm:$0xff]
    %v83 = vld [vmem:[%s1 + $0x68] sm:$0xff]
    %v84 = vld [vmem:[%s1 + $0x70] sm:$0xff]
    %v85 = vld [vmem:[%s1 + $0x78] sm:$0xff]
    %v86 = vld [vmem:[%s1 + $0x80] sm:$0xff]
    %v87 = vld [vmem:[%s1 + $0x88] sm:$0xff]
    %v88 = vld [vmem:[%s1 + $0x90] sm:$0xff]
    %v89 = vld [vmem:[%s1 + $0x98] sm:$0xff]
    %v90 = vld [vmem:[%s1 + $0xa0] sm:$0xff]
    %v91 = vld [vmem:[%s1 + $0xa8] sm:$0xff]
    %v92 = vld [vmem:[%s1 + $0xb0] sm:$0xff]
    %v93 = vld [vmem:[%s1 + $0xb8] sm:$0xff]
    %v94 = vld [vmem:[%s1 + $0xc0] sm:$0xff]
    %v95 = vld [vmem:[%s1 + $0xc8] sm:$0xff]
    %v96 = vld [vmem:[%s1 + $0xd0] sm:$0xff]
    %v97 = vld [vmem:[%s1 + $0xd8] sm:$0xff]
    %v98 = vld [vmem:[%s1 + $0xe0] sm:$0xff]
    %v99 = vld [vmem:[%s1 + $0xe8] sm:$0xff]
    %v100 = vld [vmem:[%s1 + $0xf0] sm:$0xff]
    %v101 = vld [vmem:[%s1 + $0xf8] sm:$0xff]
    %v102 = vld [vmem:[%s1 + $0x100] sm:$0xff]
    %v103 = vld [vmem:[%s1 + $0x108] sm:$0xff]
    %v104 = vld [vmem:[%s1 + $0x110] sm:$0xff]
    %v105 = vld [vmem:[%s1 + $0x118] sm:$0xff]
    %v106 = vld [vmem:[%s1 + $0x120] sm:$0xff]
    %v107 = vld [vmem:[%s1 + $0x128] sm:$0xff]
    %v108 = vld [vmem:[%s1 + $0x130] sm:$0xff]
    %v109 = vld [vmem:[%s1 + $0x138] sm:$0xff]
    %v110 = vld [vmem:[%s1 + $0x140] sm:$0xff]
    %v111 = vld [vmem:[%s1 + $0x148] sm:$0xff]
    %v112 = vld [vmem:[%s1 + $0x150] sm:$0xff]
    %v113 = vld [vmem:[%s1 + $0x158] sm:$0xff]
    %v114 = vld [vmem:[%s1 + $0x160] sm:$0xff]
    %v115 = vld [vmem:[%s1 + $0x168] sm:$0xff]
    %v116 = vld [vmem:[%s1 + $0x170] sm:$0xff]
    %v117 = vld [vmem:[%s1 + $0x178] sm:$0xff]
    %v118 = vld [vmem:[%s1 + $0x180] sm:$0xff]
    %v119 = vld [vmem:[%s1 + $0x188] sm:$0xff]
    %v120 = vld [vmem:[%s1 + $0x190] sm:$0xff]
    %v121 = vld [vmem:[%s1 + $0x198] sm:$0xff]
    %v122 = vld [vmem:[%s1 + $0x1a0] sm:$0xff]
    %v123 = vld [vmem:[%s1 + $0x1a8] sm:$0xff]
    %v124 = vld [vmem:[%s1 + $0x1b0] sm:$0xff]
    %v125 = vld [vmem:[%s1 + $0x1b8] sm:$0xff]
    %v126 = vld [vmem:[%s1 + $0x1c0] sm:$0xff]
    %v127 = vld [vmem:[%s1 + $0x1c8] sm:$0xff]
    %v128 = vld [vmem:[%s1 + $0x1d0] sm:$0xff]
    %v129 = vld [vmem:[%s1 + $0x1d8] sm:$0xff]
    %v130 = vld [vmem:[%s1 + $0x1e0] sm:$0xff]
    %v131 = vld [vmem:[%s1 + $0x1e8] sm:$0xff]
    %v132 = vld [vmem:[%s1 + $0x1f0] sm:$0xff]
    %v133 = vld [vmem:[%s1 + $0x1f8] sm:$0xff]
    %v134 = vld [vmem:[%s1 + $0x200] sm:$0xff]
    %v135 = vld [vmem:[%s1 + $0x208] sm:$0xff]
    %v136 = vld [vmem:[%s1 + $0x210] sm:$0xff]
    %v137 = vld [vmem:[%s1 + $0x218] sm:$0xff]
    %v138 = vld [vmem:[%s1 + $0x220] sm:$0xff]
    %v139 = vld [vmem:[%s1 + $0x228] sm:$0xff]
    %v140 = vld [vmem:[%s1 + $0x230] sm:$0xff]
    %v141 = vld [vmem:[%s1 + $0x238] sm:$0xff]
    %v142 = vld [vmem:[%s1 + $0x240] sm:$0xff]
    %v143 = vld [vmem:[%s1 + $0x248] sm:$0xff]
    %v144 = vld [vmem:[%s1 + $0x250] sm:$0xff]
    %v145 = vld [vmem:[%s1 + $0x258] sm:$0xff]
    %v146 = vld [vmem:[%s1 + $0x260] sm:$0xff]
    %v147 = vld [vmem:[%s1 + $0x268] sm:$0xff]
    %v148 = vld [vmem:[%s1 + $0x270] sm:$0xff]
    %v149 = vld [vmem:[%s1 + $0x278] sm:$0xff]
    %v150 = vld [vmem:[%s1 + $0x280] sm:$0xff]
    %v151 = vld [vmem:[%s1 + $0x288] sm:$0xff]
    %v152 = vld [vmem:[%s1 + $0x290] sm:$0xff]
    %v153 = vld [vmem:[%s1 + $0x298] sm:$0xff]
    %v154 = vld [vmem:[%s1 + $0x2a0] sm:$0xff]
    %v155 = vld [vmem:[%s1 + $0x2a8] sm:$0xff]
    %v156 = vld [vmem:[%s1 + $0x2b0] sm:$0xff]
    %v157 = vld [vmem:[%s1 + $0x2b8] sm:$0xff]
    %v158 = vld [vmem:[%s1 + $0x2c0] sm:$0xff]
    %v159 = vld [vmem:[%s1 + $0x2c8] sm:$0xff]
    %v160 = vld [vmem:[%s1 + $0x2d0] sm:$0xff]
    %v161 = vld [vmem:[%s1 + $0x2d8] sm:$0xff]
    %v162 = vld [vmem:[%s1 + $0x2e0] sm:$0xff]
    %v163 = vld [vmem:[%s1 + $0x2e8] sm:$0xff]
    %v164 = vld [vmem:[%s1 + $0x2f0] sm:$0xff]
    %v165 = vld [vmem:[%s1 + $0x2f8] sm:$0xff]
    %v166 = vld [vmem:[%s1 + $0x300] sm:$0xff]
    %v167 = vld [vmem:[%s1 + $0x308] sm:$0xff]
    %v168 = vld [vmem:[%s1 + $0x310] sm:$0xff]
    %v169 = vld [vmem:[%s1 + $0x318] sm:$0xff]
    %v170 = vld [vmem:[%s1 + $0x320] sm:$0xff]
    %v171 = vld [vmem:[%s1 + $0x328] sm:$0xff]
    %v172 = vld [vmem:[%s1 + $0x330] sm:$0xff]
    %v173 = vld [vmem:[%s1 + $0x338] sm:$0xff]
    %v174 = vld [vmem:[%s1 + $0x340] sm:$0xff]
    %v175 = vld [vmem:[%s1 + $0x348] sm:$0xff]
    %v176 = vld [vmem:[%s1 + $0x350] sm:$0xff]
    %v177 = vld [vmem:[%s1 + $0x358] sm:$0xff]
    %v178 = vld [vmem:[%s1 + $0x360] sm:$0xff]
    %v179 = vld [vmem:[%s1 + $0x368] sm:$0xff]
    %v180 = vld [vmem:[%s1 + $0x370] sm:$0xff]
    %v181 = vld [vmem:[%s1 + $0x378] sm:$0xff]
    %v182 = vld [vmem:[%s1 + $0x380] sm:$0xff]
    %v183 = vld [vmem:[%s1 + $0x388] sm:$0xff]
    %v184 = vld [vmem:[%s1 + $0x390] sm:$0xff]
    %v185 = vld [vmem:[%s1 + $0x398] sm:$0xff]
    %v186 = vld [vmem:[%s1 + $0x3a0] sm:$0xff]
    %v187 = vld [vmem:[%s1 + $0x3a8] sm:$0xff]
    %v188 = vld [vmem:[%s1 + $0x3b0] sm:$0xff]
    %v189 = vld [vmem:[%s1 + $0x3b8] sm:$0xff]
    %v190 = vld [vmem:[%s1 + $0x3c0] sm:$0xff]
    %v191 = vld [vmem:[%s1 + $0x3c8] sm:$0xff]
    %v192 = vld [vmem:[%s1 + $0x3d0] sm:$0xff]
    %v193 = vld [vmem:[%s1 + $0x3d8] sm:$0xff]
    %v194 = vld [vmem:[%s1 + $0x3e0] sm:$0xff]
    %v195 = vld [vmem:[%s1 + $0x3e8] sm:$0xff]
    %v196 = vld [vmem:[%s1 + $0x3f0] sm:$0xff]
    %v197 = vld [vmem:[%s1 + $0x3f8] sm:$0xff]
    %v326 = vunpack.c.l.b16 %v70
    %v327 = vunpack.c.h.b16 %v70
    %v328 = vunpack.c.l.b16 %v71
    %v329 = vunpack.c.h.b16 %v71
    %v330 = vunpack.c.l.b16 %v72
    %v331 = vunpack.c.h.b16 %v72
    %v332 = vunpack.c.l.b16 %v73
    %v333 = vunpack.c.h.b16 %v73
    %v334 = vunpack.c.l.b16 %v74
    %v335 = vunpack.c.h.b16 %v74
    %v336 = vunpack.c.l.b16 %v75
    %v337 = vunpack.c.h.b16 %v75
    %v338 = vunpack.c.l.b16 %v76
    %v339 = vunpack.c.h.b16 %v76
    %v340 = vunpack.c.l.b16 %v77
    %v341 = vunpack.c.h.b16 %v77
    %v342 = vunpack.c.l.b16 %v78
    %v343 = vunpack.c.h.b16 %v78
    %v344 = vunpack.c.l.b16 %v79
    %v345 = vunpack.c.h.b16 %v79
    %v346 = vunpack.c.l.b16 %v80
    %v347 = vunpack.c.h.b16 %v80
    %v348 = vunpack.c.l.b16 %v81
    %v349 = vunpack.c.h.b16 %v81
    %v350 = vunpack.c.l.b16 %v82
    %v351 = vunpack.c.h.b16 %v82
    %v352 = vunpack.c.l.b16 %v83
    %v353 = vunpack.c.h.b16 %v83
    %v354 = vunpack.c.l.b16 %v84
    %v355 = vunpack.c.h.b16 %v84
    %v356 = vunpack.c.l.b16 %v85
    %v357 = vunpack.c.h.b16 %v85
    %v358 = vunpack.c.l.b16 %v86
    %v359 = vunpack.c.h.b16 %v86
    %v360 = vunpack.c.l.b16 %v87
    %v361 = vunpack.c.h.b16 %v87
    %v362 = vunpack.c.l.b16 %v88
    %v363 = vunpack.c.h.b16 %v88
    %v364 = vunpack.c.l.b16 %v89
    %v365 = vunpack.c.h.b16 %v89
    %v366 = vunpack.c.l.b16 %v90
    %v367 = vunpack.c.h.b16 %v90
    %v368 = vunpack.c.l.b16 %v91
    %v369 = vunpack.c.h.b16 %v91
    %v370 = vunpack.c.l.b16 %v92
    %v371 = vunpack.c.h.b16 %v92
    %v372 = vunpack.c.l.b16 %v93
    %v373 = vunpack.c.h.b16 %v93
    %v374 = vunpack.c.l.b16 %v94
    %v375 = vunpack.c.h.b16 %v94
    %v376 = vunpack.c.l.b16 %v95
    %v377 = vunpack.c.h.b16 %v95
    %v378 = vunpack.c.l.b16 %v96
    %v379 = vunpack.c.h.b16 %v96
    %v380 = vunpack.c.l.b16 %v97
    %v381 = vunpack.c.h.b16 %v97
    %v382 = vunpack.c.l.b16 %v98
    %v383 = vunpack.c.h.b16 %v98
    %v384 = vunpack.c.l.b16 %v99
    %v385 = vunpack.c.h.b16 %v99
    %v386 = vunpack.c.l.b16 %v100
    %v387 = vunpack.c.h.b16 %v100
    %v388 = vunpack.c.l.b16 %v101
    %v389 = vunpack.c.h.b16 %v101
    %v390 = vunpack.c.l.b16 %v102
    %v391 = vunpack.c.h.b16 %v102
    %v392 = vunpack.c.l.b16 %v103
    %v393 = vunpack.c.h.b16 %v103
    %v394 = vunpack.c.l.b16 %v104
    %v395 = vunpack.c.h.b16 %v104
    %v396 = vunpack.c.l.b16 %v105
    %v397 = vunpack.c.h.b16 %v105
    %v398 = vunpack.c.l.b16 %v106
    %v399 = vunpack.c.h.b16 %v106
    %v400 = vunpack.c.l.b16 %v107
    %v401 = vunpack.c.h.b16 %v107
    %v402 = vunpack.c.l.b16 %v108
    %v403 = vunpack.c.h.b16 %v108
    %v404 = vunpack.c.l.b16 %v109
    %v405 = vunpack.c.h.b16 %v109
    %v406 = vunpack.c.l.b16 %v110
    %v407 = vunpack.c.h.b16 %v110
    %v408 = vunpack.c.l.b16 %v111
    %v409 = vunpack.c.h.b16 %v111
    %v410 = vunpack.c.l.b16 %v112
    %v411 = vunpack.c.h.b16 %v112
    %v412 = vunpack.c.l.b16 %v113
    %v413 = vunpack.c.h.b16 %v113
    %v414 = vunpack.c.l.b16 %v114
    %v415 = vunpack.c.h.b16 %v114
    %v416 = vunpack.c.l.b16 %v115
    %v417 = vunpack.c.h.b16 %v115
    %v418 = vunpack.c.l.b16 %v116
    %v419 = vunpack.c.h.b16 %v116
    %v420 = vunpack.c.l.b16 %v117
    %v421 = vunpack.c.h.b16 %v117
    %v422 = vunpack.c.l.b16 %v118
    %v423 = vunpack.c.h.b16 %v118
    %v424 = vunpack.c.l.b16 %v119
    %v425 = vunpack.c.h.b16 %v119
    %v426 = vunpack.c.l.b16 %v120
    %v427 = vunpack.c.h.b16 %v120
    %v428 = vunpack.c.l.b16 %v121
    %v429 = vunpack.c.h.b16 %v121
    %v430 = vunpack.c.l.b16 %v122
    %v431 = vunpack.c.h.b16 %v122
    %v432 = vunpack.c.l.b16 %v123
    %v433 = vunpack.c.h.b16 %v123
    %v434 = vunpack.c.l.b16 %v124
    %v435 = vunpack.c.h.b16 %v124
    %v436 = vunpack.c.l.b16 %v125
    %v437 = vunpack.c.h.b16 %v125
    %v438 = vunpack.c.l.b16 %v126
    %v439 = vunpack.c.h.b16 %v126
    %v440 = vunpack.c.l.b16 %v127
    %v441 = vunpack.c.h.b16 %v127
    %v442 = vunpack.c.l.b16 %v128
    %v443 = vunpack.c.h.b16 %v128
    %v444 = vunpack.c.l.b16 %v129
    %v445 = vunpack.c.h.b16 %v129
    %v446 = vunpack.c.l.b16 %v130
    %v447 = vunpack.c.h.b16 %v130
    %v448 = vunpack.c.l.b16 %v131
    %v449 = vunpack.c.h.b16 %v131
    %v450 = vunpack.c.l.b16 %v132
    %v451 = vunpack.c.h.b16 %v132
    %v452 = vunpack.c.l.b16 %v133
    %v453 = vunpack.c.h.b16 %v133
    %v454 = vunpack.c.l.b16 %v134
    %v455 = vunpack.c.h.b16 %v134
    %v456 = vunpack.c.l.b16 %v135
    %v457 = vunpack.c.h.b16 %v135
    %v458 = vunpack.c.l.b16 %v136
    %v459 = vunpack.c.h.b16 %v136
    %v460 = vunpack.c.l.b16 %v137
    %v461 = vunpack.c.h.b16 %v137
    %v462 = vunpack.c.l.b16 %v138
    %v463 = vunpack.c.h.b16 %v138
    %v464 = vunpack.c.l.b16 %v139
    %v465 = vunpack.c.h.b16 %v139
    %v466 = vunpack.c.l.b16 %v140
    %v467 = vunpack.c.h.b16 %v140
    %v468 = vunpack.c.l.b16 %v141
    %v469 = vunpack.c.h.b16 %v141
    %v470 = vunpack.c.l.b16 %v142
    %v471 = vunpack.c.h.b16 %v142
    %v472 = vunpack.c.l.b16 %v143
    %v473 = vunpack.c.h.b16 %v143
    %v474 = vunpack.c.l.b16 %v144
    %v475 = vunpack.c.h.b16 %v144
    %v476 = vunpack.c.l.b16 %v145
    %v477 = vunpack.c.h.b16 %v145
    %v478 = vunpack.c.l.b16 %v146
    %v479 = vunpack.c.h.b16 %v146
    %v480 = vunpack.c.l.b16 %v147
    %v481 = vunpack.c.h.b16 %v147
    %v482 = vunpack.c.l.b16 %v148
    %v483 = vunpack.c.h.b16 %v148
    %v484 = vunpack.c.l.b16 %v149
    %v485 = vunpack.c.h.b16 %v149
    %v486 = vunpack.c.l.b16 %v150
    %v487 = vunpack.c.h.b16 %v150
    %v488 = vunpack.c.l.b16 %v151
    %v489 = vunpack.c.h.b16 %v151
    %v490 = vunpack.c.l.b16 %v152
    %v491 = vunpack.c.h.b16 %v152
    %v492 = vunpack.c.l.b16 %v153
    %v493 = vunpack.c.h.b16 %v153
    %v494 = vunpack.c.l.b16 %v154
    %v495 = vunpack.c.h.b16 %v154
    %v496 = vunpack.c.l.b16 %v155
    %v497 = vunpack.c.h.b16 %v155
    %v498 = vunpack.c.l.b16 %v156
    %v499 = vunpack.c.h.b16 %v156
    %v500 = vunpack.c.l.b16 %v157
    %v501 = vunpack.c.h.b16 %v157
    %v502 = vunpack.c.l.b16 %v158
    %v503 = vunpack.c.h.b16 %v158
    %v504 = vunpack.c.l.b16 %v159
    %v505 = vunpack.c.h.b16 %v159
    %v506 = vunpack.c.l.b16 %v160
    %v507 = vunpack.c.h.b16 %v160
    %v508 = vunpack.c.l.b16 %v161
    %v509 = vunpack.c.h.b16 %v161
    %v510 = vunpack.c.l.b16 %v162
    %v511 = vunpack.c.h.b16 %v162
    %v512 = vunpack.c.l.b16 %v163
    %v513 = vunpack.c.h.b16 %v163
    %v514 = vunpack.c.l.b16 %v164
    %v515 = vunpack.c.h.b16 %v164
    %v516 = vunpack.c.l.b16 %v165
    %v517 = vunpack.c.h.b16 %v165
    %v518 = vunpack.c.l.b16 %v166
    %v519 = vunpack.c.h.b16 %v166
    %v520 = vunpack.c.l.b16 %v167
    %v521 = vunpack.c.h.b16 %v167
    %v522 = vunpack.c.l.b16 %v168
    %v523 = vunpack.c.h.b16 %v168
    %v524 = vunpack.c.l.b16 %v169
    %v525 = vunpack.c.h.b16 %v169
    %v526 = vunpack.c.l.b16 %v170
    %v527 = vunpack.c.h.b16 %v170
    %v528 = vunpack.c.l.b16 %v171
    %v529 = vunpack.c.h.b16 %v171
    %v530 = vunpack.c.l.b16 %v172
    %v531 = vunpack.c.h.b16 %v172
    %v532 = vunpack.c.l.b16 %v173
    %v533 = vunpack.c.h.b16 %v173
    %v534 = vunpack.c.l.b16 %v174
    %v535 = vunpack.c.h.b16 %v174
    %v536 = vunpack.c.l.b16 %v175
    %v537 = vunpack.c.h.b16 %v175
    %v538 = vunpack.c.l.b16 %v176
    %v539 = vunpack.c.h.b16 %v176
    %v540 = vunpack.c.l.b16 %v177
    %v541 = vunpack.c.h.b16 %v177
    %v542 = vunpack.c.l.b16 %v178
    %v543 = vunpack.c.h.b16 %v178
    %v544 = vunpack.c.l.b16 %v179
    %v545 = vunpack.c.h.b16 %v179
    %v546 = vunpack.c.l.b16 %v180
    %v547 = vunpack.c.h.b16 %v180
    %v548 = vunpack.c.l.b16 %v181
    %v549 = vunpack.c.h.b16 %v181
    %v550 = vunpack.c.l.b16 %v182
    %v551 = vunpack.c.h.b16 %v182
    %v552 = vunpack.c.l.b16 %v183
    %v553 = vunpack.c.h.b16 %v183
    %v554 = vunpack.c.l.b16 %v184
    %v555 = vunpack.c.h.b16 %v184
    %v556 = vunpack.c.l.b16 %v185
    %v557 = vunpack.c.h.b16 %v185
    %v558 = vunpack.c.l.b16 %v186
    %v559 = vunpack.c.h.b16 %v186
    %v560 = vunpack.c.l.b16 %v187
    %v561 = vunpack.c.h.b16 %v187
    %v562 = vunpack.c.l.b16 %v188
    %v563 = vunpack.c.h.b16 %v188
    %v564 = vunpack.c.l.b16 %v189
    %v565 = vunpack.c.h.b16 %v189
    %v566 = vunpack.c.l.b16 %v190
    %v567 = vunpack.c.h.b16 %v190
    %v568 = vunpack.c.l.b16 %v191
    %v569 = vunpack.c.h.b16 %v191
    %v570 = vunpack.c.l.b16 %v192
    %v571 = vunpack.c.h.b16 %v192
    %v572 = vunpack.c.l.b16 %v193
    %v573 = vunpack.c.h.b16 %v193
    %v574 = vunpack.c.l.b16 %v194
    %v575 = vunpack.c.h.b16 %v194
    %v576 = vunpack.c.l.b16 %v195
    %v577 = vunpack.c.h.b16 %v195
    %v578 = vunpack.c.l.b16 %v196
    %v579 = vunpack.c.h.b16 %v196
    %v580 = vunpack.c.l.b16 %v197
    %v581 = vunpack.c.h.b16 %v197
    %v582 = vpack.c.b16 %v330, %v326
    %v583 = vpack.c.b16 %v331, %v327
    %v584 = vpack.c.b16 %v332, %v328
    %v585 = vpack.c.b16 %v333, %v329
    %v586 = vpack.c.b16 %v338, %v334
    %v587 = vpack.c.b16 %v339, %v335
    %v588 = vpack.c.b16 %v340, %v336
    %v589 = vpack.c.b16 %v341, %v337
    %v590 = vpack.c.b16 %v346, %v342
    %v591 = vpack.c.b16 %v347, %v343
    %v592 = vpack.c.b16 %v348, %v344
    %v593 = vpack.c.b16 %v349, %v345
    %v594 = vpack.c.b16 %v354, %v350
    %v595 = vpack.c.b16 %v355, %v351
    %v596 = vpack.c.b16 %v356, %v352
    %v597 = vpack.c.b16 %v357, %v353
    %v598 = vpack.c.b16 %v362, %v358
    %v599 = vpack.c.b16 %v363, %v359
    %v600 = vpack.c.b16 %v364, %v360
    %v601 = vpack.c.b16 %v365, %v361
    %v602 = vpack.c.b16 %v370, %v366
    %v603 = vpack.c.b16 %v371, %v367
    %v604 = vpack.c.b16 %v372, %v368
    %v605 = vpack.c.b16 %v373, %v369
    %v606 = vpack.c.b16 %v378, %v374
    %v607 = vpack.c.b16 %v379, %v375
    %v608 = vpack.c.b16 %v380, %v376
    %v609 = vpack.c.b16 %v381, %v377
    %v610 = vpack.c.b16 %v386, %v382
    %v611 = vpack.c.b16 %v387, %v383
    %v612 = vpack.c.b16 %v388, %v384
    %v613 = vpack.c.b16 %v389, %v385
    %v614 = vpack.c.b16 %v394, %v390
    %v615 = vpack.c.b16 %v395, %v391
    %v616 = vpack.c.b16 %v396, %v392
    %v617 = vpack.c.b16 %v397, %v393
    %v618 = vpack.c.b16 %v402, %v398
    %v619 = vpack.c.b16 %v403, %v399
    %v620 = vpack.c.b16 %v404, %v400
    %v621 = vpack.c.b16 %v405, %v401
    %v622 = vpack.c.b16 %v410, %v406
    %v623 = vpack.c.b16 %v411, %v407
    %v624 = vpack.c.b16 %v412, %v408
    %v625 = vpack.c.b16 %v413, %v409
    %v626 = vpack.c.b16 %v418, %v414
    %v627 = vpack.c.b16 %v419, %v415
    %v628 = vpack.c.b16 %v420, %v416
    %v629 = vpack.c.b16 %v421, %v417
    %v630 = vpack.c.b16 %v426, %v422
    %v631 = vpack.c.b16 %v427, %v423
    %v632 = vpack.c.b16 %v428, %v424
    %v633 = vpack.c.b16 %v429, %v425
    %v634 = vpack.c.b16 %v434, %v430
    %v635 = vpack.c.b16 %v435, %v431
    %v636 = vpack.c.b16 %v436, %v432
    %v637 = vpack.c.b16 %v437, %v433
    %v638 = vpack.c.b16 %v442, %v438
    %v639 = vpack.c.b16 %v443, %v439
    %v640 = vpack.c.b16 %v444, %v440
    %v641 = vpack.c.b16 %v445, %v441
    %v642 = vpack.c.b16 %v450, %v446
    %v643 = vpack.c.b16 %v451, %v447
    %v644 = vpack.c.b16 %v452, %v448
    %v645 = vpack.c.b16 %v453, %v449
    %v646 = vpack.c.b16 %v458, %v454
    %v647 = vpack.c.b16 %v459, %v455
    %v648 = vpack.c.b16 %v460, %v456
    %v649 = vpack.c.b16 %v461, %v457
    %v650 = vpack.c.b16 %v466, %v462
    %v651 = vpack.c.b16 %v467, %v463
    %v652 = vpack.c.b16 %v468, %v464
    %v653 = vpack.c.b16 %v469, %v465
    %v654 = vpack.c.b16 %v474, %v470
    %v655 = vpack.c.b16 %v475, %v471
    %v656 = vpack.c.b16 %v476, %v472
    %v657 = vpack.c.b16 %v477, %v473
    %v658 = vpack.c.b16 %v482, %v478
    %v659 = vpack.c.b16 %v483, %v479
    %v660 = vpack.c.b16 %v484, %v480
    %v661 = vpack.c.b16 %v485, %v481
    %v662 = vpack.c.b16 %v490, %v486
    %v663 = vpack.c.b16 %v491, %v487
    %v664 = vpack.c.b16 %v492, %v488
    %v665 = vpack.c.b16 %v493, %v489
    %v666 = vpack.c.b16 %v498, %v494
    %v667 = vpack.c.b16 %v499, %v495
    %v668 = vpack.c.b16 %v500, %v496
    %v669 = vpack.c.b16 %v501, %v497
    %v670 = vpack.c.b16 %v506, %v502
    %v671 = vpack.c.b16 %v507, %v503
    %v672 = vpack.c.b16 %v508, %v504
    %v673 = vpack.c.b16 %v509, %v505
    %v674 = vpack.c.b16 %v514, %v510
    %v675 = vpack.c.b16 %v515, %v511
    %v676 = vpack.c.b16 %v516, %v512
    %v677 = vpack.c.b16 %v517, %v513
    %v678 = vpack.c.b16 %v522, %v518
    %v679 = vpack.c.b16 %v523, %v519
    %v680 = vpack.c.b16 %v524, %v520
    %v681 = vpack.c.b16 %v525, %v521
    %v682 = vpack.c.b16 %v530, %v526
    %v683 = vpack.c.b16 %v531, %v527
    %v684 = vpack.c.b16 %v532, %v528
    %v685 = vpack.c.b16 %v533, %v529
    %v686 = vpack.c.b16 %v538, %v534
    %v687 = vpack.c.b16 %v539, %v535
    %v688 = vpack.c.b16 %v540, %v536
    %v689 = vpack.c.b16 %v541, %v537
    %v690 = vpack.c.b16 %v546, %v542
    %v691 = vpack.c.b16 %v547, %v543
    %v692 = vpack.c.b16 %v548, %v544
    %v693 = vpack.c.b16 %v549, %v545
    %v694 = vpack.c.b16 %v554, %v550
    %v695 = vpack.c.b16 %v555, %v551
    %v696 = vpack.c.b16 %v556, %v552
    %v697 = vpack.c.b16 %v557, %v553
    %v698 = vpack.c.b16 %v562, %v558
    %v699 = vpack.c.b16 %v563, %v559
    %v700 = vpack.c.b16 %v564, %v560
    %v701 = vpack.c.b16 %v565, %v561
    %v702 = vpack.c.b16 %v570, %v566
    %v703 = vpack.c.b16 %v571, %v567
    %v704 = vpack.c.b16 %v572, %v568
    %v705 = vpack.c.b16 %v573, %v569
    %v706 = vpack.c.b16 %v578, %v574
    %v707 = vpack.c.b16 %v579, %v575
    %v708 = vpack.c.b16 %v580, %v576
    %v709 = vpack.c.b16 %v581, %v577
    %838 = vmatprep.subr.bf16.mxu0 %v583
    %839 = vmatpush1.bf16.msra.mxu0 %v582
    %840 = vmatprep.subr.bf16.mxu0 %v587
    %841 = vmatpush1.bf16.msra.mxu0 %v586
    %842 = vmatprep.subr.bf16.mxu0 %v591
    %843 = vmatpush1.bf16.msra.mxu0 %v590
    %844 = vmatprep.subr.bf16.mxu0 %v595
    %845 = vmatpush1.bf16.msra.mxu0 %v594
    %846 = vmatprep.subr.bf16.mxu0 %v599
    %847 = vmatpush1.bf16.msra.mxu0 %v598
    %848 = vmatprep.subr.bf16.mxu0 %v603
    %849 = vmatpush1.bf16.msra.mxu0 %v602
    %850 = vmatprep.subr.bf16.mxu0 %v607
    %851 = vmatpush1.bf16.msra.mxu0 %v606
    %852 = vmatprep.subr.bf16.mxu0 %v611
    %853 = vmatpush1.bf16.msra.mxu0 %v610
    %854 = vmatprep.subr.bf16.mxu0 %v615
    %855 = vmatpush1.bf16.msra.mxu0 %v614
    %856 = vmatprep.subr.bf16.mxu0 %v619
    %857 = vmatpush1.bf16.msra.mxu0 %v618
    %858 = vmatprep.subr.bf16.mxu0 %v623
    %859 = vmatpush1.bf16.msra.mxu0 %v622
    %860 = vmatprep.subr.bf16.mxu0 %v627
    %861 = vmatpush1.bf16.msra.mxu0 %v626
    %862 = vmatprep.subr.bf16.mxu0 %v631
    %863 = vmatpush1.bf16.msra.mxu0 %v630
    %864 = vmatprep.subr.bf16.mxu0 %v635
    %865 = vmatpush1.bf16.msra.mxu0 %v634
    %866 = vmatprep.subr.bf16.mxu0 %v639
    %867 = vmatpush1.bf16.msra.mxu0 %v638
    %868 = vmatprep.subr.bf16.mxu0 %v643
    %869 = vmatpush1.bf16.msra.mxu0 %v642
    %870 = vmatprep.mubr.bf16.mxu0 %v67
    %871 = vmatmul.mubr.bf16.gmra.mrb[0].mxu0 %v66
    %v872 = vpop.f32.mrb[0].mxu0
    %v873 = vadd.f32 0.0, %v872
    %v874 = vpop.f32.mrb[0].mxu0
    %v875 = vadd.f32 0.0, %v874
    %v876 = vpop.f32.mrb[0].mxu0
    %v877 = vpop.f32.mrb[0].mxu0
    %878 = vdwg.mxu0
    %879 = vmatprep.subr.bf16.mxu0 %v647
    %880 = vmatpush1.bf16.msra.mxu0 %v646
    %881 = vmatprep.subr.bf16.mxu0 %v651
    %882 = vmatpush1.bf16.msra.mxu0 %v650
    %883 = vmatprep.subr.bf16.mxu0 %v655
    %884 = vmatpush1.bf16.msra.mxu0 %v654
    %885 = vmatprep.subr.bf16.mxu0 %v659
    %886 = vmatpush1.bf16.msra.mxu0 %v658
    %887 = vmatprep.subr.bf16.mxu0 %v663
    %888 = vmatpush1.bf16.msra.mxu0 %v662
    %889 = vmatprep.subr.bf16.mxu0 %v667
    %890 = vmatpush1.bf16.msra.mxu0 %v666
    %891 = vmatprep.subr.bf16.mxu0 %v671
    %892 = vmatpush1.bf16.msra.mxu0 %v670
    %893 = vmatprep.subr.bf16.mxu0 %v675
    %894 = vmatpush1.bf16.msra.mxu0 %v674
    %895 = vmatprep.subr.bf16.mxu0 %v679
    %896 = vmatpush1.bf16.msra.mxu0 %v678
    %897 = vmatprep.subr.bf16.mxu0 %v683
    %898 = vmatpush1.bf16.msra.mxu0 %v682
    %899 = vmatprep.subr.bf16.mxu0 %v687
    %900 = vmatpush1.bf16.msra.mxu0 %v686
    %901 = vmatprep.subr.bf16.mxu0 %v691
    %902 = vmatpush1.bf16.msra.mxu0 %v690
    %903 = vmatprep.subr.bf16.mxu0 %v695
    %904 = vmatpush1.bf16.msra.mxu0 %v694
    %905 = vmatprep.subr.bf16.mxu0 %v699
    %906 = vmatpush1.bf16.msra.mxu0 %v698
    %907 = vmatprep.subr.bf16.mxu0 %v703
    %908 = vmatpush1.bf16.msra.mxu0 %v702
    %909 = vmatprep.subr.bf16.mxu0 %v707
    %910 = vmatpush1.bf16.msra.mxu0 %v706
    %911 = vmatprep.mubr.bf16.mxu0 %v69
    %912 = vmatmul.mubr.bf16.gmra.mrb[0].mxu0 %v68
    %v913 = vpop.f32.mrb[0].mxu0
    %v914 = vadd.f32 %v873, %v913
    %v915 = vpop.f32.mrb[0].mxu0
    %v916 = vadd.f32 %v875, %v915
    %v917 = vpop.f32.mrb[0].mxu0
    %v918 = vpop.f32.mrb[0].mxu0
    %919 = vdwg.mxu0
    %920 = vmatprep.subr.bf16.mxu0 %v585
    %921 = vmatpush1.bf16.msra.mxu0 %v584
    %922 = vmatprep.subr.bf16.mxu0 %v589
    %923 = vmatpush1.bf16.msra.mxu0 %v588
    %924 = vmatprep.subr.bf16.mxu0 %v593
    %925 = vmatpush1.bf16.msra.mxu0 %v592
    %926 = vmatprep.subr.bf16.mxu0 %v597
    %927 = vmatpush1.bf16.msra.mxu0 %v596
    %928 = vmatprep.subr.bf16.mxu0 %v601
    %929 = vmatpush1.bf16.msra.mxu0 %v600
    %930 = vmatprep.subr.bf16.mxu0 %v605
    %931 = vmatpush1.bf16.msra.mxu0 %v604
    %932 = vmatprep.subr.bf16.mxu0 %v609
    %933 = vmatpush1.bf16.msra.mxu0 %v608
    %934 = vmatprep.subr.bf16.mxu0 %v613
    %935 = vmatpush1.bf16.msra.mxu0 %v612
    %936 = vmatprep.subr.bf16.mxu0 %v617
    %937 = vmatpush1.bf16.msra.mxu0 %v616
    %938 = vmatprep.subr.bf16.mxu0 %v621
    %939 = vmatpush1.bf16.msra.mxu0 %v620
    %940 = vmatprep.subr.bf16.mxu0 %v625
    %941 = vmatpush1.bf16.msra.mxu0 %v624
    %942 = vmatprep.subr.bf16.mxu0 %v629
    %943 = vmatpush1.bf16.msra.mxu0 %v628
    %944 = vmatprep.subr.bf16.mxu0 %v633
    %945 = vmatpush1.bf16.msra.mxu0 %v632
    %946 = vmatprep.subr.bf16.mxu0 %v637
    %947 = vmatpush1.bf16.msra.mxu0 %v636
    %948 = vmatprep.subr.bf16.mxu0 %v641
    %949 = vmatpush1.bf16.msra.mxu0 %v640
    %950 = vmatprep.subr.bf16.mxu0 %v645
    %951 = vmatpush1.bf16.msra.mxu0 %v644
    %952 = vmatprep.mubr.bf16.mxu0 %v67
    %953 = vmatmul.mubr.bf16.gmra.mrb[0].mxu0 %v66
    %v954 = vpop.f32.mrb[0].mxu0
    %v955 = vadd.f32 0.0, %v954
    %v956 = vpop.f32.mrb[0].mxu0
    %v957 = vadd.f32 0.0, %v956
    %v958 = vpop.f32.mrb[0].mxu0
    %v959 = vpop.f32.mrb[0].mxu0
    %960 = vdwg.mxu0
    %961 = vmatprep.subr.bf16.mxu0 %v649
    %962 = vmatpush1.bf16.msra.mxu0 %v648
    %963 = vmatprep.subr.bf16.mxu0 %v653
    %964 = vmatpush1.bf16.msra.mxu0 %v652
    %965 = vmatprep.subr.bf16.mxu0 %v657
    %966 = vmatpush1.bf16.msra.mxu0 %v656
    %967 = vmatprep.subr.bf16.mxu0 %v661
    %968 = vmatpush1.bf16.msra.mxu0 %v660
    %969 = vmatprep.subr.bf16.mxu0 %v665
    %970 = vmatpush1.bf16.msra.mxu0 %v664
    %971 = vmatprep.subr.bf16.mxu0 %v669
    %972 = vmatpush1.bf16.msra.mxu0 %v668
    %973 = vmatprep.subr.bf16.mxu0 %v673
    %974 = vmatpush1.bf16.msra.mxu0 %v672
    %975 = vmatprep.subr.bf16.mxu0 %v677
    %976 = vmatpush1.bf16.msra.mxu0 %v676
    %977 = vmatprep.subr.bf16.mxu0 %v681
    %978 = vmatpush1.bf16.msra.mxu0 %v680
    %979 = vmatprep.subr.bf16.mxu0 %v685
    %980 = vmatpush1.bf16.msra.mxu0 %v684
    %981 = vmatprep.subr.bf16.mxu0 %v689
    %982 = vmatpush1.bf16.msra.mxu0 %v688
    %983 = vmatprep.subr.bf16.mxu0 %v693
    %984 = vmatpush1.bf16.msra.mxu0 %v692
    %985 = vmatprep.subr.bf16.mxu0 %v697
    %986 = vmatpush1.bf16.msra.mxu0 %v696
    %987 = vmatprep.subr.bf16.mxu0 %v701
    %988 = vmatpush1.bf16.msra.mxu0 %v700
    %989 = vmatprep.subr.bf16.mxu0 %v705
    %990 = vmatpush1.bf16.msra.mxu0 %v704
    %991 = vmatprep.subr.bf16.mxu0 %v709
    %992 = vmatpush1.bf16.msra.mxu0 %v708
    %993 = vmatprep.mubr.bf16.mxu0 %v69
    %994 = vmatmul.mubr.bf16.gmra.mrb[0].mxu0 %v68
    %v995 = vpop.f32.mrb[0].mxu0
    %v996 = vadd.f32 %v955, %v995
    %v997 = vpop.f32.mrb[0].mxu0
    %v998 = vadd.f32 %v957, %v997
    %v999 = vpop.f32.mrb[0].mxu0
    %v1000 = vpop.f32.mrb[0].mxu0
    %1001 = vdwg.mxu0
    %vm1002 = vcmask 1041408
    %v1003 = vsel %vm1002, %v914, 0.0
    %v1004 = vrot.slane %v1003, 4
    %v1005 = vadd.f32 %v1003, %v1004
    %v1006 = vrot.slane %v1005, 2
    %v1007 = vadd.f32 %v1005, %v1006
    %v1008 = vrot.slane %v1007, 1
    %v1009 = vadd.f32 %v1007, %v1008
    %v1010 = vsel %vm1002, %v916, 0.0
    %v1011 = vrot.slane %v1010, 4
    %v1012 = vadd.f32 %v1010, %v1011
    %v1013 = vrot.slane %v1012, 2
    %v1014 = vadd.f32 %v1012, %v1013
    %v1015 = vrot.slane %v1014, 1
    %v1016 = vadd.f32 %v1014, %v1015
    %v1017 = vsel %vm1002, %v996, 0.0
    %v1018 = vrot.slane %v1017, 4
    %v1019 = vadd.f32 %v1017, %v1018
    %v1020 = vrot.slane %v1019, 2
    %v1021 = vadd.f32 %v1019, %v1020
    %v1022 = vrot.slane %v1021, 1
    %v1023 = vadd.f32 %v1021, %v1022
    %v1024 = vsel %vm1002, %v998, 0.0
    %v1025 = vrot.slane %v1024, 4
    %v1026 = vadd.f32 %v1024, %v1025
    %v1027 = vrot.slane %v1026, 2
    %v1028 = vadd.f32 %v1026, %v1027
    %v1029 = vrot.slane %v1028, 1
    %v1030 = vadd.f32 %v1028, %v1029
    %v1031 = vmul.f32 %v1009, 0.5
    %v1032 = vmul.f32 %v1016, 0.5
    %v1033 = vmul.f32 %v1023, 0.5
    %v1034 = vmul.f32 %v1030, 0.5
    %v1035 = vsub.f32 %v914, %v1031
    %v1036 = vsub.f32 %v916, %v1032
    %v1037 = vsub.f32 %v996, %v1033
    %v1038 = vsub.f32 %v998, %v1034
    %v1039 = vmul.f32 %v1035, %v1035
    %v1040 = vmul.f32 %v1036, %v1036
    %v1041 = vmul.f32 %v1037, %v1037
    %v1042 = vmul.f32 %v1038, %v1038
    %v1043 = vsel %vm1002, %v1039, 0.0
    %v1044 = vrot.slane %v1043, 4
    %v1045 = vadd.f32 %v1043, %v1044
    %v1046 = vrot.slane %v1045, 2
    %v1047 = vadd.f32 %v1045, %v1046
    %v1048 = vrot.slane %v1047, 1
    %v1049 = vadd.f32 %v1047, %v1048
    %v1050 = vsel %vm1002, %v1040, 0.0
    %v1051 = vrot.slane %v1050, 4
    %v1052 = vadd.f32 %v1050, %v1051
    %v1053 = vrot.slane %v1052, 2
    %v1054 = vadd.f32 %v1052, %v1053
    %v1055 = vrot.slane %v1054, 1
    %v1056 = vadd.f32 %v1054, %v1055
    %v1057 = vsel %vm1002, %v1041, 0.0
    %v1058 = vrot.slane %v1057, 4
    %v1059 = vadd.f32 %v1057, %v1058
    %v1060 = vrot.slane %v1059, 2
    %v1061 = vadd.f32 %v1059, %v1060
    %v1062 = vrot.slane %v1061, 1
    %v1063 = vadd.f32 %v1061, %v1062
    %v1064 = vsel %vm1002, %v1042, 0.0
    %v1065 = vrot.slane %v1064, 4
    %v1066 = vadd.f32 %v1064, %v1065
    %v1067 = vrot.slane %v1066, 2
    %v1068 = vadd.f32 %v1066, %v1067
    %v1069 = vrot.slane %v1068, 1
    %v1070 = vadd.f32 %v1068, %v1069
    %v1071 = vmul.f32 %v1049, 0.5
    %v1072 = vmul.f32 %v1056, 0.5
    %v1073 = vmul.f32 %v1063, 0.5
    %v1074 = vmul.f32 %v1070, 0.5
    %v1075 = vadd.f32 %v1071, 1e-05
    %v1076 = vadd.f32 %v1072, 1e-05
    %v1077 = vadd.f32 %v1073, 1e-05
    %v1078 = vadd.f32 %v1074, 1e-05
    %v1079 = vrsqrt.pop %v1075
    %v1080 = vrsqrt.pop %v1076
    %v1081 = vrsqrt.pop %v1077
    %v1082 = vrsqrt.pop %v1078
    %v1083 = vmul.f32 %v1035, %v1079
    %v1084 = vmul.f32 %v1036, %v1080
    %v1085 = vmul.f32 %v1037, %v1081
    %v1086 = vmul.f32 %v1038, %v1082
    %v1087 = vld [vmem:[%s2] sm:$0xf]
    %v1089 = vlaneseq
    %v1090 = vshrl.u32 %v1089, 7
    %v1091 = vsub.s32 0, %v1090
    %v1092 = vrot.slane %v1087, %v1091
    %v1093 = vlaneseq
    %v1094 = vshrl.u32 %v1093, 7
    %v1095 = vsub.s32 1, %v1094
    %v1096 = vrot.slane %v1087, %v1095
    %v1097 = vlaneseq
    %v1098 = vshrl.u32 %v1097, 7
    %v1099 = vsub.s32 2, %v1098
    %v1100 = vrot.slane %v1087, %v1099
    %v1101 = vlaneseq
    %v1102 = vshrl.u32 %v1101, 7
    %v1103 = vsub.s32 3, %v1102
    %v1104 = vrot.slane %v1087, %v1103
    %v1109 = vmul.f32 %v1083, %v1092
    %v1110 = vmul.f32 %v1084, %v1096
    %v1111 = vmul.f32 %v1085, %v1100
    %v1112 = vmul.f32 %v1086, %v1104
    %v1113 = vld [vmem:[%s3] sm:$0xf]
    %v1115 = vlaneseq
    %v1116 = vshrl.u32 %v1115, 7
    %v1117 = vsub.s32 0, %v1116
    %v1118 = vrot.slane %v1113, %v1117
    %v1119 = vlaneseq
    %v1120 = vshrl.u32 %v1119, 7
    %v1121 = vsub.s32 1, %v1120
    %v1122 = vrot.slane %v1113, %v1121
    %v1123 = vlaneseq
    %v1124 = vshrl.u32 %v1123, 7
    %v1125 = vsub.s32 2, %v1124
    %v1126 = vrot.slane %v1113, %v1125
    %v1127 = vlaneseq
    %v1128 = vshrl.u32 %v1127, 7
    %v1129 = vsub.s32 3, %v1128
    %v1130 = vrot.slane %v1113, %v1129
    %v1135 = vadd.f32 %v1109, %v1118
    %v1136 = vadd.f32 %v1110, %v1122
    %v1137 = vadd.f32 %v1111, %v1126
    %v1138 = vadd.f32 %v1112, %v1130
    %v1139 = vmax.f32 %v1135, 0.0
    %v1140 = vmax.f32 %v1136, 0.0
    %v1141 = vmax.f32 %v1137, 0.0
    %v1142 = vmax.f32 %v1138, 0.0
    %v1143 = vpack.c.bf16 %v1139, %v1139
    %v1144 = vpack.c.bf16 %v1140, %v1140
    %v1145 = vpack.c.bf16 %v1141, %v1141
    %v1146 = vpack.c.bf16 %v1142, %v1142
    %v1147 = vld [vmem:[%s4] sm:$0xf]
    %v1148 = vld [vmem:[%s4 + $0x4] sm:$0xf]
    %v1149 = vld [vmem:[%s4 + $0x8] sm:$0xf]
    %v1150 = vld [vmem:[%s4 + $0xc] sm:$0xf]
    %v1151 = vld [vmem:[%s4 + $0x10] sm:$0xf]
    %v1152 = vld [vmem:[%s4 + $0x14] sm:$0xf]
    %v1153 = vld [vmem:[%s4 + $0x18] sm:$0xf]
    %v1154 = vld [vmem:[%s4 + $0x1c] sm:$0xf]
    %v1155 = vld [vmem:[%s4 + $0x20] sm:$0xf]
    %v1156 = vld [vmem:[%s4 + $0x24] sm:$0xf]
    %v1157 = vld [vmem:[%s4 + $0x28] sm:$0xf]
    %v1158 = vld [vmem:[%s4 + $0x2c] sm:$0xf]
    %v1159 = vld [vmem:[%s4 + $0x30] sm:$0xf]
    %v1160 = vld [vmem:[%s4 + $0x34] sm:$0xf]
    %v1161 = vld [vmem:[%s4 + $0x38] sm:$0xf]
    %v1162 = vld [vmem:[%s4 + $0x3c] sm:$0xf]
    %v1163 = vld [vmem:[%s4 + $0x40] sm:$0xf]
    %v1164 = vld [vmem:[%s4 + $0x44] sm:$0xf]
    %v1165 = vld [vmem:[%s4 + $0x48] sm:$0xf]
    %v1166 = vld [vmem:[%s4 + $0x4c] sm:$0xf]
    %v1167 = vld [vmem:[%s4 + $0x50] sm:$0xf]
    %v1168 = vld [vmem:[%s4 + $0x54] sm:$0xf]
    %v1169 = vld [vmem:[%s4 + $0x58] sm:$0xf]
    %v1170 = vld [vmem:[%s4 + $0x5c] sm:$0xf]
    %v1171 = vld [vmem:[%s4 + $0x60] sm:$0xf]
    %v1172 = vld [vmem:[%s4 + $0x64] sm:$0xf]
    %v1173 = vld [vmem:[%s4 + $0x68] sm:$0xf]
    %v1174 = vld [vmem:[%s4 + $0x6c] sm:$0xf]
    %v1175 = vld [vmem:[%s4 + $0x70] sm:$0xf]
    %v1176 = vld [vmem:[%s4 + $0x74] sm:$0xf]
    %v1177 = vld [vmem:[%s4 + $0x78] sm:$0xf]
    %v1178 = vld [vmem:[%s4 + $0x7c] sm:$0xf]
    %v1179 = vld [vmem:[%s4 + $0x80] sm:$0xf]
    %v1180 = vld [vmem:[%s4 + $0x84] sm:$0xf]
    %v1181 = vld [vmem:[%s4 + $0x88] sm:$0xf]
    %v1182 = vld [vmem:[%s4 + $0x8c] sm:$0xf]
    %v1183 = vld [vmem:[%s4 + $0x90] sm:$0xf]
    %v1184 = vld [vmem:[%s4 + $0x94] sm:$0xf]
    %v1185 = vld [vmem:[%s4 + $0x98] sm:$0xf]
    %v1186 = vld [vmem:[%s4 + $0x9c] sm:$0xf]
    %v1187 = vld [vmem:[%s4 + $0xa0] sm:$0xf]
    %v1188 = vld [vmem:[%s4 + $0xa4] sm:$0xf]
    %v1189 = vld [vmem:[%s4 + $0xa8] sm:$0xf]
    %v1190 = vld [vmem:[%s4 + $0xac] sm:$0xf]
    %v1191 = vld [vmem:[%s4 + $0xb0] sm:$0xf]
    %v1192 = vld [vmem:[%s4 + $0xb4] sm:$0xf]
    %v1193 = vld [vmem:[%s4 + $0xb8] sm:$0xf]
    %v1194 = vld [vmem:[%s4 + $0xbc] sm:$0xf]
    %v1195 = vld [vmem:[%s4 + $0xc0] sm:$0xf]
    %v1196 = vld [vmem:[%s4 + $0xc4] sm:$0xf]
    %v1197 = vld [vmem:[%s4 + $0xc8] sm:$0xf]
    %v1198 = vld [vmem:[%s4 + $0xcc] sm:$0xf]
    %v1199 = vld [vmem:[%s4 + $0xd0] sm:$0xf]
    %v1200 = vld [vmem:[%s4 + $0xd4] sm:$0xf]
    %v1201 = vld [vmem:[%s4 + $0xd8] sm:$0xf]
    %v1202 = vld [vmem:[%s4 + $0xdc] sm:$0xf]
    %v1203 = vld [vmem:[%s4 + $0xe0] sm:$0xf]
    %v1204 = vld [vmem:[%s4 + $0xe4] sm:$0xf]
    %v1205 = vld [vmem:[%s4 + $0xe8] sm:$0xf]
    %v1206 = vld [vmem:[%s4 + $0xec] sm:$0xf]
    %v1207 = vld [vmem:[%s4 + $0xf0] sm:$0xf]
    %v1208 = vld [vmem:[%s4 + $0xf4] sm:$0xf]
    %v1209 = vld [vmem:[%s4 + $0xf8] sm:$0xf]
    %v1210 = vld [vmem:[%s4 + $0xfc] sm:$0xf]
    %v1211 = vld [vmem:[%s5] sm:$0x1]
    %v1213 = vlaneseq
    %v1214 = vshrl.u32 %v1213, 7
    %v1215 = vsub.s32 0, %v1214
    %v1216 = vrot.slane %v1211, %v1215
    %v1282 = vunpack.c.l.b16 %v1147
    %v1283 = vunpack.c.l.b16 %v1148
    %v1284 = vunpack.c.l.b16 %v1149
    %v1285 = vunpack.c.l.b16 %v1150
    %v1286 = vunpack.c.l.b16 %v1151
    %v1287 = vunpack.c.l.b16 %v1152
    %v1288 = vunpack.c.l.b16 %v1153
    %v1289 = vunpack.c.l.b16 %v1154
    %v1290 = vunpack.c.l.b16 %v1155
    %v1291 = vunpack.c.l.b16 %v1156
    %v1292 = vunpack.c.l.b16 %v1157
    %v1293 = vunpack.c.l.b16 %v1158
    %v1294 = vunpack.c.l.b16 %v1159
    %v1295 = vunpack.c.l.b16 %v1160
    %v1296 = vunpack.c.l.b16 %v1161
    %v1297 = vunpack.c.l.b16 %v1162
    %v1298 = vunpack.c.l.b16 %v1163
    %v1299 = vunpack.c.l.b16 %v1164
    %v1300 = vunpack.c.l.b16 %v1165
    %v1301 = vunpack.c.l.b16 %v1166
    %v1302 = vunpack.c.l.b16 %v1167
    %v1303 = vunpack.c.l.b16 %v1168
    %v1304 = vunpack.c.l.b16 %v1169
    %v1305 = vunpack.c.l.b16 %v1170
    %v1306 = vunpack.c.l.b16 %v1171
    %v1307 = vunpack.c.l.b16 %v1172
    %v1308 = vunpack.c.l.b16 %v1173
    %v1309 = vunpack.c.l.b16 %v1174
    %v1310 = vunpack.c.l.b16 %v1175
    %v1311 = vunpack.c.l.b16 %v1176
    %v1312 = vunpack.c.l.b16 %v1177
    %v1313 = vunpack.c.l.b16 %v1178
    %v1314 = vunpack.c.l.b16 %v1179
    %v1315 = vunpack.c.l.b16 %v1180
    %v1316 = vunpack.c.l.b16 %v1181
    %v1317 = vunpack.c.l.b16 %v1182
    %v1318 = vunpack.c.l.b16 %v1183
    %v1319 = vunpack.c.l.b16 %v1184
    %v1320 = vunpack.c.l.b16 %v1185
    %v1321 = vunpack.c.l.b16 %v1186
    %v1322 = vunpack.c.l.b16 %v1187
    %v1323 = vunpack.c.l.b16 %v1188
    %v1324 = vunpack.c.l.b16 %v1189
    %v1325 = vunpack.c.l.b16 %v1190
    %v1326 = vunpack.c.l.b16 %v1191
    %v1327 = vunpack.c.l.b16 %v1192
    %v1328 = vunpack.c.l.b16 %v1193
    %v1329 = vunpack.c.l.b16 %v1194
    %v1330 = vunpack.c.l.b16 %v1195
    %v1331 = vunpack.c.l.b16 %v1196
    %v1332 = vunpack.c.l.b16 %v1197
    %v1333 = vunpack.c.l.b16 %v1198
    %v1334 = vunpack.c.l.b16 %v1199
    %v1335 = vunpack.c.l.b16 %v1200
    %v1336 = vunpack.c.l.b16 %v1201
    %v1337 = vunpack.c.l.b16 %v1202
    %v1338 = vunpack.c.l.b16 %v1203
    %v1339 = vunpack.c.l.b16 %v1204
    %v1340 = vunpack.c.l.b16 %v1205
    %v1341 = vunpack.c.l.b16 %v1206
    %v1342 = vunpack.c.l.b16 %v1207
    %v1343 = vunpack.c.l.b16 %v1208
    %v1344 = vunpack.c.l.b16 %v1209
    %v1345 = vunpack.c.l.b16 %v1210
    %v1346 = vpack.c.b16 %v1283, %v1282
    %v1347 = vpack.c.b16 %v1285, %v1284
    %v1348 = vpack.c.b16 %v1287, %v1286
    %v1349 = vpack.c.b16 %v1289, %v1288
    %v1350 = vpack.c.b16 %v1291, %v1290
    %v1351 = vpack.c.b16 %v1293, %v1292
    %v1352 = vpack.c.b16 %v1295, %v1294
    %v1353 = vpack.c.b16 %v1297, %v1296
    %v1354 = vpack.c.b16 %v1299, %v1298
    %v1355 = vpack.c.b16 %v1301, %v1300
    %v1356 = vpack.c.b16 %v1303, %v1302
    %v1357 = vpack.c.b16 %v1305, %v1304
    %v1358 = vpack.c.b16 %v1307, %v1306
    %v1359 = vpack.c.b16 %v1309, %v1308
    %v1360 = vpack.c.b16 %v1311, %v1310
    %v1361 = vpack.c.b16 %v1313, %v1312
    %v1362 = vpack.c.b16 %v1315, %v1314
    %v1363 = vpack.c.b16 %v1317, %v1316
    %v1364 = vpack.c.b16 %v1319, %v1318
    %v1365 = vpack.c.b16 %v1321, %v1320
    %v1366 = vpack.c.b16 %v1323, %v1322
    %v1367 = vpack.c.b16 %v1325, %v1324
    %v1368 = vpack.c.b16 %v1327, %v1326
    %v1369 = vpack.c.b16 %v1329, %v1328
    %v1370 = vpack.c.b16 %v1331, %v1330
    %v1371 = vpack.c.b16 %v1333, %v1332
    %v1372 = vpack.c.b16 %v1335, %v1334
    %v1373 = vpack.c.b16 %v1337, %v1336
    %v1374 = vpack.c.b16 %v1339, %v1338
    %v1375 = vpack.c.b16 %v1341, %v1340
    %v1376 = vpack.c.b16 %v1343, %v1342
    %v1377 = vpack.c.b16 %v1345, %v1344
    %1410 = vmatprep.subr.bf16.mxu0 0
    %1411 = vmatpush1.bf16.msra.mxu0 %v1346
    %1412 = vmatprep.subr.bf16.mxu0 0
    %1413 = vmatpush1.bf16.msra.mxu0 %v1347
    %1414 = vmatprep.subr.bf16.mxu0 0
    %1415 = vmatpush1.bf16.msra.mxu0 %v1348
    %1416 = vmatprep.subr.bf16.mxu0 0
    %1417 = vmatpush1.bf16.msra.mxu0 %v1349
    %1418 = vmatprep.subr.bf16.mxu0 0
    %1419 = vmatpush1.bf16.msra.mxu0 %v1350
    %1420 = vmatprep.subr.bf16.mxu0 0
    %1421 = vmatpush1.bf16.msra.mxu0 %v1351
    %1422 = vmatprep.subr.bf16.mxu0 0
    %1423 = vmatpush1.bf16.msra.mxu0 %v1352
    %1424 = vmatprep.subr.bf16.mxu0 0
    %1425 = vmatpush1.bf16.msra.mxu0 %v1353
    %1426 = vmatprep.subr.bf16.mxu0 0
    %1427 = vmatpush1.bf16.msra.mxu0 %v1354
    %1428 = vmatprep.subr.bf16.mxu0 0
    %1429 = vmatpush1.bf16.msra.mxu0 %v1355
    %1430 = vmatprep.subr.bf16.mxu0 0
    %1431 = vmatpush1.bf16.msra.mxu0 %v1356
    %1432 = vmatprep.subr.bf16.mxu0 0
    %1433 = vmatpush1.bf16.msra.mxu0 %v1357
    %1434 = vmatprep.subr.bf16.mxu0 0
    %1435 = vmatpush1.bf16.msra.mxu0 %v1358
    %1436 = vmatprep.subr.bf16.mxu0 0
    %1437 = vmatpush1.bf16.msra.mxu0 %v1359
    %1438 = vmatprep.subr.bf16.mxu0 0
    %1439 = vmatpush1.bf16.msra.mxu0 %v1360
    %1440 = vmatprep.subr.bf16.mxu0 0
    %1441 = vmatpush1.bf16.msra.mxu0 %v1361
    %1442 = vmatprep.mubr.bf16.mxu0 %v1144
    %1443 = vmatmul.mubr.bf16.gmra.mrb[0].mxu0 %v1143
    %v1444 = vpop.f32.mrb[0].mxu0
    %v1445 = vadd.f32 %v1216, %v1444
    %v1446 = vpop.f32.mrb[0].mxu0
    %v1447 = vpop.f32.mrb[0].mxu0
    %v1448 = vpop.f32.mrb[0].mxu0
    %1449 = vdwg.mxu0
    %1450 = vmatprep.subr.bf16.mxu0 0
    %1451 = vmatpush1.bf16.msra.mxu0 %v1362
    %1452 = vmatprep.subr.bf16.mxu0 0
    %1453 = vmatpush1.bf16.msra.mxu0 %v1363
    %1454 = vmatprep.subr.bf16.mxu0 0
    %1455 = vmatpush1.bf16.msra.mxu0 %v1364
    %1456 = vmatprep.subr.bf16.mxu0 0
    %1457 = vmatpush1.bf16.msra.mxu0 %v1365
    %1458 = vmatprep.subr.bf16.mxu0 0
    %1459 = vmatpush1.bf16.msra.mxu0 %v1366
    %1460 = vmatprep.subr.bf16.mxu0 0
    %1461 = vmatpush1.bf16.msra.mxu0 %v1367
    %1462 = vmatprep.subr.bf16.mxu0 0
    %1463 = vmatpush1.bf16.msra.mxu0 %v1368
    %1464 = vmatprep.subr.bf16.mxu0 0
    %1465 = vmatpush1.bf16.msra.mxu0 %v1369
    %1466 = vmatprep.subr.bf16.mxu0 0
    %1467 = vmatpush1.bf16.msra.mxu0 %v1370
    %1468 = vmatprep.subr.bf16.mxu0 0
    %1469 = vmatpush1.bf16.msra.mxu0 %v1371
    %1470 = vmatprep.subr.bf16.mxu0 0
    %1471 = vmatpush1.bf16.msra.mxu0 %v1372
    %1472 = vmatprep.subr.bf16.mxu0 0
    %1473 = vmatpush1.bf16.msra.mxu0 %v1373
    %1474 = vmatprep.subr.bf16.mxu0 0
    %1475 = vmatpush1.bf16.msra.mxu0 %v1374
    %1476 = vmatprep.subr.bf16.mxu0 0
    %1477 = vmatpush1.bf16.msra.mxu0 %v1375
    %1478 = vmatprep.subr.bf16.mxu0 0
    %1479 = vmatpush1.bf16.msra.mxu0 %v1376
    %1480 = vmatprep.subr.bf16.mxu0 0
    %1481 = vmatpush1.bf16.msra.mxu0 %v1377
    %1482 = vmatprep.mubr.bf16.mxu0 %v1146
    %1483 = vmatmul.mubr.bf16.gmra.mrb[0].mxu0 %v1145
    %v1484 = vpop.f32.mrb[0].mxu0
    %v1485 = vadd.f32 %v1445, %v1484
    %v1486 = vpop.f32.mrb[0].mxu0
    %v1487 = vpop.f32.mrb[0].mxu0
    %v1488 = vpop.f32.mrb[0].mxu0
    %1489 = vdwg.mxu0
    %1490 = vst [vmem:[#allocation2] sm:$0x3] %v1485
    %v1491 = vpack.c.bf16 %v1485, %v1485
    %v1492 = vld [vmem:[%s6] sm:$0xf]
    %v1493 = vld [vmem:[%s6 + $0x4] sm:$0xf]
    %v1494 = vld [vmem:[%s6 + $0x8] sm:$0xf]
    %v1495 = vld [vmem:[%s6 + $0xc] sm:$0xf]
    %v1496 = vld [vmem:[%s6 + $0x10] sm:$0xf]
    %v1497 = vld [vmem:[%s6 + $0x14] sm:$0xf]
    %v1498 = vld [vmem:[%s6 + $0x18] sm:$0xf]
    %v1499 = vld [vmem:[%s6 + $0x1c] sm:$0xf]
    %v1500 = vld [vmem:[%s6 + $0x20] sm:$0xf]
    %v1501 = vld [vmem:[%s6 + $0x24] sm:$0xf]
    %v1502 = vld [vmem:[%s6 + $0x28] sm:$0xf]
    %v1503 = vld [vmem:[%s6 + $0x2c] sm:$0xf]
    %v1504 = vld [vmem:[%s6 + $0x30] sm:$0xf]
    %v1505 = vld [vmem:[%s6 + $0x34] sm:$0xf]
    %v1506 = vld [vmem:[%s6 + $0x38] sm:$0xf]
    %v1507 = vld [vmem:[%s6 + $0x3c] sm:$0xf]
    %v1524 = vunpack.c.l.b16 %v1492
    %v1525 = vunpack.c.l.b16 %v1493
    %v1526 = vunpack.c.l.b16 %v1494
    %v1527 = vunpack.c.l.b16 %v1495
    %v1528 = vunpack.c.l.b16 %v1496
    %v1529 = vunpack.c.l.b16 %v1497
    %v1530 = vunpack.c.l.b16 %v1498
    %v1531 = vunpack.c.l.b16 %v1499
    %v1532 = vunpack.c.l.b16 %v1500
    %v1533 = vunpack.c.l.b16 %v1501
    %v1534 = vunpack.c.l.b16 %v1502
    %v1535 = vunpack.c.l.b16 %v1503
    %v1536 = vunpack.c.l.b16 %v1504
    %v1537 = vunpack.c.l.b16 %v1505
    %v1538 = vunpack.c.l.b16 %v1506
    %v1539 = vunpack.c.l.b16 %v1507
    %v1540 = vpack.c.b16 %v1525, %v1524
    %v1541 = vpack.c.b16 %v1527, %v1526
    %v1542 = vpack.c.b16 %v1529, %v1528
    %v1543 = vpack.c.b16 %v1531, %v1530
    %v1544 = vpack.c.b16 %v1533, %v1532
    %v1545 = vpack.c.b16 %v1535, %v1534
    %v1546 = vpack.c.b16 %v1537, %v1536
    %v1547 = vpack.c.b16 %v1539, %v1538
    %1556 = vmatprep.subr.bf16.mxu0 0
    %1557 = vmatpush1.bf16.msra.mxu0 %v1540
    %1558 = vmatprep.subr.bf16.mxu0 0
    %1559 = vmatpush1.bf16.msra.mxu0 %v1541
    %1560 = vmatprep.subr.bf16.mxu0 0
    %1561 = vmatpush1.bf16.msra.mxu0 %v1542
    %1562 = vmatprep.subr.bf16.mxu0 0
    %1563 = vmatpush1.bf16.msra.mxu0 %v1543
    %1564 = vmatprep.subr.bf16.mxu0 0
    %1565 = vmatpush1.bf16.msra.mxu0 %v1544
    %1566 = vmatprep.subr.bf16.mxu0 0
    %1567 = vmatpush1.bf16.msra.mxu0 %v1545
    %1568 = vmatprep.subr.bf16.mxu0 0
    %1569 = vmatpush1.bf16.msra.mxu0 %v1546
    %1570 = vmatprep.subr.bf16.mxu0 0
    %1571 = vmatpush1.bf16.msra.mxu0 %v1547
    %1572 = vmatprep.subr.bf16.mxu0 0
    %1573 = vmatpush1.bf16.msra.mxu0 0
    %1574 = vmatprep.subr.bf16.mxu0 0
    %1575 = vmatpush1.bf16.msra.mxu0 0
    %1576 = vmatprep.subr.bf16.mxu0 0
    %1577 = vmatpush1.bf16.msra.mxu0 0
    %1578 = vmatprep.subr.bf16.mxu0 0
    %1579 = vmatpush1.bf16.msra.mxu0 0
    %1580 = vmatprep.subr.bf16.mxu0 0
    %1581 = vmatpush1.bf16.msra.mxu0 0
    %1582 = vmatprep.subr.bf16.mxu0 0
    %1583 = vmatpush1.bf16.msra.mxu0 0
    %1584 = vmatprep.subr.bf16.mxu0 0
    %1585 = vmatpush1.bf16.msra.mxu0 0
    %1586 = vmatprep.subr.bf16.mxu0 0
    %1587 = vmatpush1.bf16.msra.mxu0 0
    %1588 = vmatprep.mubr.bf16.mxu0 0
    %1589 = vmatmul.mubr.bf16.gmra.mrb[0].mxu0 %v1491
    %v1590 = vpop.f32.mrb[0].mxu0
    %v1591 = vadd.f32 0.0, %v1590
    %v1592 = vpop.f32.mrb[0].mxu0
    %v1593 = vpop.f32.mrb[0].mxu0
    %v1594 = vpop.f32.mrb[0].mxu0
    %1595 = vdwg.mxu0
    %v1596 = vsel %vm1002, %v1591, 0.0
    %v1597 = vrot.slane %v1596, 4
    %v1598 = vadd.f32 %v1596, %v1597
    %v1599 = vrot.slane %v1598, 2
    %v1600 = vadd.f32 %v1598, %v1599
    %v1601 = vrot.slane %v1600, 1
    %v1602 = vadd.f32 %v1600, %v1601
    %v1603 = vmul.f32 %v1602, 0.5
    %v1604 = vsub.f32 %v1591, %v1603
    %v1605 = vmul.f32 %v1604, %v1604
    %v1606 = vsel %vm1002, %v1605, 0.0
    %v1607 = vrot.slane %v1606, 4
    %v1608 = vadd.f32 %v1606, %v1607
    %v1609 = vrot.slane %v1608, 2
    %v1610 = vadd.f32 %v1608, %v1609
    %v1611 = vrot.slane %v1610, 1
    %v1612 = vadd.f32 %v1610, %v1611
    %v1613 = vmul.f32 %v1612, 0.5
    %v1614 = vadd.f32 %v1613, 1e-05
    %v1615 = vrsqrt.pop %v1614
    %v1616 = vmul.f32 %v1604, %v1615
    %v1617 = vld [vmem:[%s7] sm:$0x1]
    %v1619 = vlaneseq
    %v1620 = vshrl.u32 %v1619, 7
    %v1621 = vsub.s32 0, %v1620
    %v1622 = vrot.slane %v1617, %v1621
    %v1624 = vmul.f32 %v1616, %v1622
    %v1625 = vld [vmem:[%s8] sm:$0x1]
    %v1627 = vlaneseq
    %v1628 = vshrl.u32 %v1627, 7
    %v1629 = vsub.s32 0, %v1628
    %v1630 = vrot.slane %v1625, %v1629
    %v1632 = vadd.f32 %v1624, %v1630
    %v1633 = vmax.f32 %v1632, 0.0
    %v1634 = vpack.c.bf16 %v1633, %v1633
    %v1635 = vld [vmem:[%s9] sm:$0xf]
    %v1636 = vld [vmem:[%s9 + $0x4] sm:$0xf]
    %v1637 = vld [vmem:[%s9 + $0x8] sm:$0xf]
    %v1638 = vld [vmem:[%s9 + $0xc] sm:$0xf]
    %v1639 = vld [vmem:[%s9 + $0x10] sm:$0xf]
    %v1640 = vld [vmem:[%s9 + $0x14] sm:$0xf]
    %v1641 = vld [vmem:[%s9 + $0x18] sm:$0xf]
    %v1642 = vld [vmem:[%s9 + $0x1c] sm:$0xf]
    %v1643 = vld [vmem:[%s9 + $0x20] sm:$0xf]
    %v1644 = vld [vmem:[%s9 + $0x24] sm:$0xf]
    %v1645 = vld [vmem:[%s9 + $0x28] sm:$0xf]
    %v1646 = vld [vmem:[%s9 + $0x2c] sm:$0xf]
    %v1647 = vld [vmem:[%s9 + $0x30] sm:$0xf]
    %v1648 = vld [vmem:[%s9 + $0x34] sm:$0xf]
    %v1649 = vld [vmem:[%s9 + $0x38] sm:$0xf]
    %v1650 = vld [vmem:[%s9 + $0x3c] sm:$0xf]
    %v1651 = vld [vmem:[%s10] sm:$0x1]
    %v1653 = vlaneseq
    %v1654 = vshrl.u32 %v1653, 7
    %v1655 = vsub.s32 0, %v1654
    %v1656 = vrot.slane %v1651, %v1655
    %v1674 = vunpack.c.l.b16 %v1635
    %v1675 = vunpack.c.l.b16 %v1636
    %v1676 = vunpack.c.l.b16 %v1637
    %v1677 = vunpack.c.l.b16 %v1638
    %v1678 = vunpack.c.l.b16 %v1639
    %v1679 = vunpack.c.l.b16 %v1640
    %v1680 = vunpack.c.l.b16 %v1641
    %v1681 = vunpack.c.l.b16 %v1642
    %v1682 = vunpack.c.l.b16 %v1643
    %v1683 = vunpack.c.l.b16 %v1644
    %v1684 = vunpack.c.l.b16 %v1645
    %v1685 = vunpack.c.l.b16 %v1646
    %v1686 = vunpack.c.l.b16 %v1647
    %v1687 = vunpack.c.l.b16 %v1648
    %v1688 = vunpack.c.l.b16 %v1649
    %v1689 = vunpack.c.l.b16 %v1650
    %v1690 = vpack.c.b16 %v1675, %v1674
    %v1691 = vpack.c.b16 %v1677, %v1676
    %v1692 = vpack.c.b16 %v1679, %v1678
    %v1693 = vpack.c.b16 %v1681, %v1680
    %v1694 = vpack.c.b16 %v1683, %v1682
    %v1695 = vpack.c.b16 %v1685, %v1684
    %v1696 = vpack.c.b16 %v1687, %v1686
    %v1697 = vpack.c.b16 %v1689, %v1688
    %1706 = vmatprep.subr.bf16.mxu0 0
    %1707 = vmatpush1.bf16.msra.mxu0 %v1690
    %1708 = vmatprep.subr.bf16.mxu0 0
    %1709 = vmatpush1.bf16.msra.mxu0 %v1691
    %1710 = vmatprep.subr.bf16.mxu0 0
    %1711 = vmatpush1.bf16.msra.mxu0 %v1692
    %1712 = vmatprep.subr.bf16.mxu0 0
    %1713 = vmatpush1.bf16.msra.mxu0 %v1693
    %1714 = vmatprep.subr.bf16.mxu0 0
    %1715 = vmatpush1.bf16.msra.mxu0 %v1694
    %1716 = vmatprep.subr.bf16.mxu0 0
    %1717 = vmatpush1.bf16.msra.mxu0 %v1695
    %1718 = vmatprep.subr.bf16.mxu0 0
    %1719 = vmatpush1.bf16.msra.mxu0 %v1696
    %1720 = vmatprep.subr.bf16.mxu0 0
    %1721 = vmatpush1.bf16.msra.mxu0 %v1697
    %1722 = vmatprep.subr.bf16.mxu0 0
    %1723 = vmatpush1.bf16.msra.mxu0 0
    %1724 = vmatprep.subr.bf16.mxu0 0
    %1725 = vmatpush1.bf16.msra.mxu0 0
    %1726 = vmatprep.subr.bf16.mxu0 0
    %1727 = vmatpush1.bf16.msra.mxu0 0
    %1728 = vmatprep.subr.bf16.mxu0 0
    %1729 = vmatpush1.bf16.msra.mxu0 0
    %1730 = vmatprep.subr.bf16.mxu0 0
    %1731 = vmatpush1.bf16.msra.mxu0 0
    %1732 = vmatprep.subr.bf16.mxu0 0
    %1733 = vmatpush1.bf16.msra.mxu0 0
    %1734 = vmatprep.subr.bf16.mxu0 0
    %1735 = vmatpush1.bf16.msra.mxu0 0
    %1736 = vmatprep.subr.bf16.mxu0 0
    %1737 = vmatpush1.bf16.msra.mxu0 0
    %1738 = vmatprep.mubr.bf16.mxu0 0
    %1739 = vmatmul.mubr.bf16.gmra.mrb[0].mxu0 %v1634
    %v1740 = vpop.f32.mrb[0].mxu0
    %v1741 = vadd.f32 %v1656, %v1740
    %v1742 = vpop.f32.mrb[0].mxu0
    %v1743 = vpop.f32.mrb[0].mxu0
    %v1744 = vpop.f32.mrb[0].mxu0
    %1745 = vdwg.mxu0
    %1746 = vst [vmem:[#allocation4] sm:$0x3] %v1741
    // Predicated region
    $region46: #{siamese_arm_forward.3} parent=1 // pred_check
      _
    $region47: #{siamese_arm_forward.3} parent=1 // pred_check_branch
      %1748 = sbr.rel (0) target = $region49
    $region48: #{siamese_arm_forward.3} parent=1 // pred_region
      %s1750 = ssub.s32 32, 32
      %1751 = vsyncadd [#allocation3], %s1750
      %s1753 = sshll.u32 [#allocation2], 4
      %s1754 = int_to_ptr.vmem [resolvable:$true] %s1753
      %1756 = dma.vmem_to_hbm [thread:$0]  %s1754, 32, %s11, [#allocation3]
    $region49: #{siamese_arm_forward.3} parent=1 // pred_fallthru
      _
    // Predicated region
    $region50: #{siamese_arm_forward.3} parent=1 // pred_check
      _
    $region51: #{siamese_arm_forward.3} parent=1 // pred_check_branch
      %1758 = sbr.rel (0) target = $region53
    $region52: #{siamese_arm_forward.3} parent=1 // pred_region
      %s1760 = ssub.s32 32, 32
      %1761 = vsyncadd [#allocation5], %s1760
      %s1763 = sshll.u32 [#allocation4], 4
      %s1764 = int_to_ptr.vmem [resolvable:$true] %s1763
      %1766 = dma.vmem_to_hbm [thread:$0]  %s1764, 32, %s12, [#allocation5]
    $region53: #{siamese_arm_forward.3} parent=1 // pred_fallthru
      _
    // Predicated region
    $region54: #{siamese_arm_forward.3} parent=1 // pred_check
      _
    $region55: #{siamese_arm_forward.3} parent=1 // pred_check_branch
      %1768 = sbr.rel (0) target = $region57
    $region56: #{siamese_arm_forward.3} parent=1 // pred_region
      %1769 = dma.done [#allocation3], 32
    $region57: #{siamese_arm_forward.3} parent=1 // pred_fallthru
      _
    // Predicated region
    $region58: #{siamese_arm_forward.3} parent=1 // pred_check
      _
    $region59: #{siamese_arm_forward.3} parent=1 // pred_check_branch
      %1771 = sbr.rel (0) target = $region61
    $region60: #{siamese_arm_forward.3} parent=1 // pred_region
      %1772 = dma.done [#allocation5], 32
    $region61: #{siamese_arm_forward.3} parent=1 // pred_fallthru
      _
    %1773 = vsyncpa [#allocation3], 1
    %1774 = vsyncpa [#allocation5], 1

</llo_original>
